<compile_context>
chip_gen: v5e
topology: v5e:2x2
jax: 0.10.0
libtpu: 0.0.40
codegen_flags: <defaults>
</compile_context>

<pallas_src>
import functools
import math

import jax
import jax.numpy as jnp
from jax.experimental import pallas as pl
from jax.experimental.pallas import tpu as pltpu

LN_EPS = 1e-12
MASK_BIAS = -1e9   # f32-safe additive mask; switch to finfo.min-based if scores go bf16


# ----------------------------------------------------------------------------
# Pallas kernels
# ----------------------------------------------------------------------------
def linear_kernel(x_ref, w_ref, b_ref, o_ref):
    # x: (tm, K) f32, w: (K, N) bf16, b: (1, N) f32 -> o: (tm, N) f32
    x = x_ref[...].astype(jnp.bfloat16)
    o_ref[...] = (
        jnp.dot(x, w_ref[...], preferred_element_type=jnp.float32) + b_ref[...]
    ).astype(o_ref.dtype)


def linear_gelu_kernel(x_ref, w_ref, b_ref, o_ref):
    # fused matmul + bias + GELU (tanh approximation)
    # TODO(synk): HF DistilBERT uses exact erf GELU; tanh approx differs at ~1e-3.
    x = x_ref[...].astype(jnp.bfloat16)
    y = jnp.dot(x, w_ref[...], preferred_element_type=jnp.float32) + b_ref[...]
    c = math.sqrt(2.0 / math.pi)
    o_ref[...] = (
        0.5 * y * (1.0 + jnp.tanh(c * (y + 0.044715 * y * y * y)))
    ).astype(o_ref.dtype)


def linear_add_ln_kernel(x_ref, w_ref, b_ref, res_ref, g_ref, beta_ref, o_ref):
    # fused: y = x @ w + b ; y = y + residual ; LayerNorm(y)  (stats in f32)
    x = x_ref[...].astype(jnp.bfloat16)
    y = jnp.dot(x, w_ref[...], preferred_element_type=jnp.float32) + b_ref[...]
    y = y + res_ref[...]
    mean = jnp.mean(y, axis=-1, keepdims=True)
    var = jnp.mean((y - mean) ** 2, axis=-1, keepdims=True)
    o_ref[...] = (
        (y - mean) * jax.lax.rsqrt(var + LN_EPS) * g_ref[...] + beta_ref[...]
    ).astype(o_ref.dtype)


def layernorm_kernel(x_ref, g_ref, b_ref, o_ref):
    # x: (tm, H), g/b: (1, H); LayerNorm over last axis (DistilBERT eps=1e-12)
    x = x_ref[...]
    mean = jnp.mean(x, axis=-1, keepdims=True)
    var = jnp.mean((x - mean) ** 2, axis=-1, keepdims=True)
    o_ref[...] = (
        (x - mean) * jax.lax.rsqrt(var + LN_EPS) * g_ref[...] + b_ref[...]
    ).astype(o_ref.dtype)


def attn_kernel(qkv_ref, bias_ref, o_ref, *, n_heads, d_head, scale):
    # One batch per grid step; all heads handled here; single lane-dense (S, H) store.
    H = n_heads * d_head
    qkv = qkv_ref[...]            # (S, 3H) f32, loaded once
    bias = bias_ref[0]            # (1, S) additive key mask (0 / -1e9)
    ctx = []
    for h in range(n_heads):      # static unroll; n_heads is a Python constant
        q = qkv[:, h * d_head:(h + 1) * d_head].astype(jnp.bfloat16)
        k = qkv[:, H + h * d_head:H + (h + 1) * d_head].astype(jnp.bfloat16)
        v = qkv[:, 2 * H + h * d_head:2 * H + (h + 1) * d_head].astype(jnp.bfloat16)
        # contract the last dims directly -> no explicit k.T (no XLU transpose)
        s = jax.lax.dot_general(
            q, k, (((1,), (1,)), ((), ())), preferred_element_type=jnp.float32
        )                                                   # (S, S)
        s = s * scale + bias
        s = s - jnp.max(s, axis=-1, keepdims=True)
        p = jnp.exp(s)
        p = p * pl.reciprocal(jnp.sum(p, axis=-1, keepdims=True), approx=True)
        ctx.append(
            jnp.dot(p.astype(jnp.bfloat16), v, preferred_element_type=jnp.float32)
        )                                                   # (S, dH)
    o_ref[...] = jnp.concatenate(ctx, axis=-1).astype(o_ref.dtype)   # (S, H)


# ----------------------------------------------------------------------------
# Wrappers around pallas_call
# ----------------------------------------------------------------------------
def _m_tile(M, tm):
    return min(tm, M)


def linear(x, w, b, *, gelu=False, tm=512):
    M, K = x.shape
    N = w.shape[1]
    tm = _m_tile(M, tm)
    kern = linear_gelu_kernel if gelu else linear_kernel
    return pl.pallas_call(
        kern,
        out_shape=jax.ShapeDtypeStruct((M, N), jnp.float32),
        grid=(pl.cdiv(M, tm),),
        in_specs=[
            pl.BlockSpec((tm, K), lambda i: (i, 0)),
            pl.BlockSpec((K, N), lambda i: (0, 0)),
            pl.BlockSpec((1, N), lambda i: (0, 0)),
        ],
        out_specs=pl.BlockSpec((tm, N), lambda i: (i, 0)),
        compiler_params=pltpu.CompilerParams(dimension_semantics=("parallel",)),
    )(x, w, b.reshape(1, N))


def linear_add_ln(x, w, b, res, gamma, beta, *, tm=512):
    # fused (x @ w + b) + residual -> LayerNorm, tiled over tokens
    M, K = x.shape
    N = w.shape[1]
    tm = _m_tile(M, tm)
    return pl.pallas_call(
        linear_add_ln_kernel,
        out_shape=jax.ShapeDtypeStruct((M, N), jnp.float32),
        grid=(pl.cdiv(M, tm),),
        in_specs=[
            pl.BlockSpec((tm, K), lambda i: (i, 0)),
            pl.BlockSpec((K, N), lambda i: (0, 0)),
            pl.BlockSpec((1, N), lambda i: (0, 0)),
            pl.BlockSpec((tm, N), lambda i: (i, 0)),
            pl.BlockSpec((1, N), lambda i: (0, 0)),
            pl.BlockSpec((1, N), lambda i: (0, 0)),
        ],
        out_specs=pl.BlockSpec((tm, N), lambda i: (i, 0)),
        compiler_params=pltpu.CompilerParams(dimension_semantics=("parallel",)),
    )(x, w, b.reshape(1, N), res, gamma.reshape(1, N), beta.reshape(1, N))


def layernorm(x, gamma, beta, *, tm=512):
    M, H = x.shape
    tm = _m_tile(M, tm)
    return pl.pallas_call(
        layernorm_kernel,
        out_shape=jax.ShapeDtypeStruct((M, H), jnp.float32),
        grid=(pl.cdiv(M, tm),),
        in_specs=[
            pl.BlockSpec((tm, H), lambda i: (i, 0)),
            pl.BlockSpec((1, H), lambda i: (0, 0)),
            pl.BlockSpec((1, H), lambda i: (0, 0)),
        ],
        out_specs=pl.BlockSpec((tm, H), lambda i: (i, 0)),
        compiler_params=pltpu.CompilerParams(dimension_semantics=("parallel",)),
    )(x, gamma.reshape(1, H), beta.reshape(1, H))


def mha_attention(qkv, mask_bias, B, S, n_heads, d_head):
    # qkv: (B*S, 3H) f32 ; mask_bias: (B, 1, S) additive f32 bias
    H = n_heads * d_head
    return pl.pallas_call(
        functools.partial(
            attn_kernel, n_heads=n_heads, d_head=d_head, scale=1.0 / math.sqrt(d_head)
        ),
        out_shape=jax.ShapeDtypeStruct((B * S, H), jnp.float32),
        grid=(B,),
        in_specs=[
            pl.BlockSpec((S, 3 * H), lambda b: (b, 0)),
            pl.BlockSpec((1, 1, S), lambda b: (b, 0, 0)),
        ],
        out_specs=pl.BlockSpec((S, H), lambda b: (b, 0)),
        compiler_params=pltpu.CompilerParams(dimension_semantics=("parallel",)),
    )(qkv, mask_bias)


# ----------------------------------------------------------------------------
# Model: parameters + forward
# ----------------------------------------------------------------------------
CFG = dict(vocab=100, max_pos=16, hidden=32, heads=4, ffn=64, layers=2, num_classes=4)


def init_params(key, cfg):
    H, FF = cfg["hidden"], cfg["ffn"]

    def nrm(k, shape, scale=0.02, dtype=jnp.bfloat16):
        # matmul weights stored in bf16 (MXU inputs); others in f32
        return (scale * jax.random.normal(k, shape, dtype=jnp.float32)).astype(dtype)

    keys = jax.random.split(key, 8 + 8 * cfg["layers"])
    it = iter(keys)
    p = {
        "word_emb": nrm(next(it), (cfg["vocab"], H), dtype=jnp.float32),
        "pos_emb": nrm(next(it), (cfg["max_pos"], H), dtype=jnp.float32),
        "emb_ln_g": jnp.ones((H,), jnp.float32),
        "emb_ln_b": jnp.zeros((H,), jnp.float32),
        "cls_w": nrm(next(it), (H, cfg["num_classes"])),
        "cls_b": jnp.zeros((cfg["num_classes"],), jnp.float32),
        "layers": [],
    }
    for _ in range(cfg["layers"]):
        p["layers"].append(
            {
                # fused Q|K|V projection weight: one (H, 3H) matmul per layer
                "w_qkv": nrm(next(it), (H, 3 * H)),
                "b_qkv": jnp.zeros((3 * H,), jnp.float32),
                "wo": nrm(next(it), (H, H)), "bo": jnp.zeros((H,), jnp.float32),
                "sa_ln_g": jnp.ones((H,), jnp.float32),
                "sa_ln_b": jnp.zeros((H,), jnp.float32),
                "w1": nrm(next(it), (H, FF)), "b1": jnp.zeros((FF,), jnp.float32),
                "w2": nrm(next(it), (FF, H)), "b2": jnp.zeros((H,), jnp.float32),
                "out_ln_g": jnp.ones((H,), jnp.float32),
                "out_ln_b": jnp.zeros((H,), jnp.float32),
            }
        )
    return p


def distilbert_forward(params, input_ids, attention_mask, cfg):
    B, S = input_ids.shape
    H, nH = cfg["hidden"], cfg["heads"]
    dH = H // nH
    M = B * S

    # --- embeddings (gather kept in plain JAX; LayerNorm in Pallas) ---
    x = params["word_emb"][input_ids] + params["pos_emb"][jnp.arange(S)][None, :, :]
    x = layernorm(x.reshape(M, H), params["emb_ln_g"], params["emb_ln_b"])
    # DistilBERT's internal dropouts + the top-level Dropout(0.6) are
    # inference-time no-ops and are omitted.

    # additive attention-mask bias computed once and reused by every layer
    mask_bias = jnp.where(
        attention_mask[:, None, :] == 1, 0.0, MASK_BIAS
    ).astype(jnp.float32)                                   # (B, 1, S)

    for lyr in params["layers"]:
        # fused QKV projection: single MXU pass -> (M, 3H)
        qkv = linear(x, lyr["w_qkv"], lyr["b_qkv"])
        # per-batch, all-heads attention with lane-dense (M, H) output
        ctx = mha_attention(qkv, mask_bias, B, S, nH, dH)
        # fused output projection + residual add + LayerNorm
        x = linear_add_ln(ctx, lyr["wo"], lyr["bo"], x, lyr["sa_ln_g"], lyr["sa_ln_b"])
        # feed-forward: fused matmul+GELU, then fused matmul+residual+LayerNorm
        ff = linear(x, lyr["w1"], lyr["b1"], gelu=True)
        x = linear_add_ln(ff, lyr["w2"], lyr["b2"], x, lyr["out_ln_g"], lyr["out_ln_b"])

    # CLS token (row 0 of each sequence) + classifier head
    cls = x[::S]                                            # (B, H) == hidden[:, 0]
    # tiny (B,H)@(H,C) matmul; kept in Pallas for completeness (plain XLA would
    # also be fine at this size, per review)
    logits = linear(cls, params["cls_w"], params["cls_b"])  # (B, num_classes)
    return logits


# ----------------------------------------------------------------------------
if __name__ == "__main__":
    key = jax.random.PRNGKey(0)
    kp, kid = jax.random.split(key)

    params = init_params(kp, CFG)

    B, S = 2, 8
    input_ids = jax.random.randint(kid, (B, S), 0, CFG["vocab"], dtype=jnp.int32)
    # second example has 3 padding positions at the end
    attention_mask = jnp.array(
        [[1, 1, 1, 1, 1, 1, 1, 1],
         [1, 1, 1, 1, 1, 0, 0, 0]], dtype=jnp.int32
    )

    fwd = jax.jit(functools.partial(distilbert_forward, cfg=CFG))
    logits = fwd(params, input_ids, attention_mask)
    jax.block_until_ready(logits)

    assert logits.shape == (B, CFG["num_classes"])
    assert bool(jnp.all(jnp.isfinite(logits)))
    print("KERNEL_OK")
</pallas_src>

<mosaic_0001>
module attributes {stable_mosaic.version = 11 : i64} {
  func.func @linear_add_ln_kernel(%arg0: i32, %arg1: memref<16x32xf32, #tpu.memory_space<vmem>>, %arg2: memref<32x32xbf16, #tpu.memory_space<vmem>>, %arg3: memref<1x32xf32, #tpu.memory_space<vmem>>, %arg4: memref<16x32xf32, #tpu.memory_space<vmem>>, %arg5: memref<1x32xf32, #tpu.memory_space<vmem>>, %arg6: memref<1x32xf32, #tpu.memory_space<vmem>>, %arg7: memref<16x32xf32, #tpu.memory_space<vmem>>) attributes {dimension_semantics = [#tpu.dimension_semantics<parallel>], iteration_bounds = array<i64: 1>, scalar_prefetch = 0 : i64, scratch_operands = 0 : i64, tpu.core_type = #tpu.core_type<tc>, window_params = [{transform_indices = @transform_0, window_bounds = array<i64: 16, 32>}, {pipeline_mode = #tpu.pipeline_mode<synchronous>, transform_indices = @transform_1, window_bounds = array<i64: 32, 32>}, {pipeline_mode = #tpu.pipeline_mode<synchronous>, transform_indices = @transform_2, window_bounds = array<i64: 1, 32>}, {transform_indices = @transform_3, window_bounds = array<i64: 16, 32>}, {pipeline_mode = #tpu.pipeline_mode<synchronous>, transform_indices = @transform_4, window_bounds = array<i64: 1, 32>}, {pipeline_mode = #tpu.pipeline_mode<synchronous>, transform_indices = @transform_5, window_bounds = array<i64: 1, 32>}, {transform_indices = @transform_6, window_bounds = array<i64: 16, 32>}]} {
    %c0 = arith.constant 0 : index
    %c0_0 = arith.constant 0 : index
    %0 = vector.load %arg1[%c0, %c0_0] : memref<16x32xf32, #tpu.memory_space<vmem>>, vector<16x32xf32>
    %1 = arith.truncf %0 : vector<16x32xf32> to vector<16x32xbf16>
    %c0_1 = arith.constant 0 : index
    %c0_2 = arith.constant 0 : index
    %2 = vector.load %arg2[%c0_1, %c0_2] : memref<32x32xbf16, #tpu.memory_space<vmem>>, vector<32x32xbf16>
    %cst = arith.constant dense<0.000000e+00> : vector<16x32xf32>
    %3 = tpu.matmul %1, %2, %cst {dimension_numbers = #tpu.dot_dimension_numbers<[1], [0], [0], [1], [0, 0, 1, 1], [], []>} : vector<16x32xbf16>, vector<32x32xbf16>, vector<16x32xf32> -> vector<16x32xf32>
    %c0_3 = arith.constant 0 : index
    %c0_4 = arith.constant 0 : index
    %4 = vector.load %arg3[%c0_3, %c0_4] : memref<1x32xf32, #tpu.memory_space<vmem>>, vector<1x32xf32>
    %5 = vector.broadcast %4 : vector<1x32xf32> to vector<16x32xf32>
    %6 = arith.addf %3, %5 : vector<16x32xf32>
    %c0_5 = arith.constant 0 : index
    %c0_6 = arith.constant 0 : index
    %7 = vector.load %arg4[%c0_5, %c0_6] : memref<16x32xf32, #tpu.memory_space<vmem>>, vector<16x32xf32>
    %8 = arith.addf %6, %7 : vector<16x32xf32>
    %cst_7 = arith.constant dense<0.000000e+00> : vector<16xf32>
    %9 = vector.multi_reduction <add>, %8, %cst_7 [1] : vector<16x32xf32> to vector<16xf32>
    %10 = vector.shape_cast %9 : vector<16xf32> to vector<16x1xf32>
    %cst_8 = arith.constant 3.200000e+01 : f32
    %11 = vector.broadcast %cst_8 : f32 to vector<16x1xf32>
    %12 = arith.divf %10, %11 : vector<16x1xf32>
    %13 = vector.broadcast %12 : vector<16x1xf32> to vector<16x32xf32>
    %14 = arith.subf %8, %13 : vector<16x32xf32>
    %15 = arith.mulf %14, %14 : vector<16x32xf32>
    %cst_9 = arith.constant dense<0.000000e+00> : vector<16xf32>
    %16 = vector.multi_reduction <add>, %15, %cst_9 [1] : vector<16x32xf32> to vector<16xf32>
    %17 = vector.shape_cast %16 : vector<16xf32> to vector<16x1xf32>
    %cst_10 = arith.constant 3.200000e+01 : f32
    %18 = vector.broadcast %cst_10 : f32 to vector<16x1xf32>
    %19 = arith.divf %17, %18 : vector<16x1xf32>
    %20 = vector.broadcast %12 : vector<16x1xf32> to vector<16x32xf32>
    %21 = arith.subf %8, %20 : vector<16x32xf32>
    %cst_11 = arith.constant 9.99999996E-13 : f32
    %22 = vector.broadcast %cst_11 : f32 to vector<16x1xf32>
    %23 = arith.addf %19, %22 : vector<16x1xf32>
    %24 = math.rsqrt %23 : vector<16x1xf32>
    %25 = vector.broadcast %24 : vector<16x1xf32> to vector<16x32xf32>
    %26 = arith.mulf %21, %25 : vector<16x32xf32>
    %c0_12 = arith.constant 0 : index
    %c0_13 = arith.constant 0 : index
    %27 = vector.load %arg5[%c0_12, %c0_13] : memref<1x32xf32, #tpu.memory_space<vmem>>, vector<1x32xf32>
    %28 = vector.broadcast %27 : vector<1x32xf32> to vector<16x32xf32>
    %29 = arith.mulf %26, %28 : vector<16x32xf32>
    %c0_14 = arith.constant 0 : index
    %c0_15 = arith.constant 0 : index
    %30 = vector.load %arg6[%c0_14, %c0_15] : memref<1x32xf32, #tpu.memory_space<vmem>>, vector<1x32xf32>
    %31 = vector.broadcast %30 : vector<1x32xf32> to vector<16x32xf32>
    %32 = arith.addf %29, %31 : vector<16x32xf32>
    %c0_16 = arith.constant 0 : index
    %c0_17 = arith.constant 0 : index
    %33 = vector.load %arg7[%c0_16, %c0_17] : memref<16x32xf32, #tpu.memory_space<vmem>>, vector<16x32xf32>
    tpu.vector_store %arg7[%c0_16, %c0_17], %32 {strides = array<i32>} : memref<16x32xf32, #tpu.memory_space<vmem>>, vector<16x32xf32>,
    return
  }
  func.func @transform_0(%arg0: i32) -> (i32, i32) {
    %c0_i32 = arith.constant 0 : i32
    %c0_i32_0 = arith.constant 0 : i32
    return %arg0, %c0_i32 : i32, i32
  }
  func.func @transform_1(%arg0: i32) -> (i32, i32) {
    %c0_i32 = arith.constant 0 : i32
    %c0_i32_0 = arith.constant 0 : i32
    %c0_i32_1 = arith.constant 0 : i32
    return %c0_i32, %c0_i32_0 : i32, i32
  }
  func.func @transform_2(%arg0: i32) -> (i32, i32) {
    %c0_i32 = arith.constant 0 : i32
    %c0_i32_0 = arith.constant 0 : i32
    %c0_i32_1 = arith.constant 0 : i32
    return %c0_i32, %c0_i32_0 : i32, i32
  }
  func.func @transform_3(%arg0: i32) -> (i32, i32) {
    %c0_i32 = arith.constant 0 : i32
    %c0_i32_0 = arith.constant 0 : i32
    return %arg0, %c0_i32 : i32, i32
  }
  func.func @transform_4(%arg0: i32) -> (i32, i32) {
    %c0_i32 = arith.constant 0 : i32
    %c0_i32_0 = arith.constant 0 : i32
    %c0_i32_1 = arith.constant 0 : i32
    return %c0_i32, %c0_i32_0 : i32, i32
  }
  func.func @transform_5(%arg0: i32) -> (i32, i32) {
    %c0_i32 = arith.constant 0 : i32
    %c0_i32_0 = arith.constant 0 : i32
    %c0_i32_1 = arith.constant 0 : i32
    return %c0_i32, %c0_i32_0 : i32, i32
  }
  func.func @transform_6(%arg0: i32) -> (i32, i32) {
    %c0_i32 = arith.constant 0 : i32
    %c0_i32_0 = arith.constant 0 : i32
    return %arg0, %c0_i32 : i32, i32
  }
}

module attributes {stable_mosaic.version = 11 : i64} {
  func.func @layernorm_kernel(%arg0: i32, %arg1: memref<16x32xf32, #tpu.memory_space<vmem>>, %arg2: memref<1x32xf32, #tpu.memory_space<vmem>>, %arg3: memref<1x32xf32, #tpu.memory_space<vmem>>, %arg4: memref<16x32xf32, #tpu.memory_space<vmem>>) attributes {dimension_semantics = [#tpu.dimension_semantics<parallel>], iteration_bounds = array<i64: 1>, scalar_prefetch = 0 : i64, scratch_operands = 0 : i64, tpu.core_type = #tpu.core_type<tc>, window_params = [{transform_indices = @transform_0, window_bounds = array<i64: 16, 32>}, {pipeline_mode = #tpu.pipeline_mode<synchronous>, transform_indices = @transform_1, window_bounds = array<i64: 1, 32>}, {pipeline_mode = #tpu.pipeline_mode<synchronous>, transform_indices = @transform_2, window_bounds = array<i64: 1, 32>}, {transform_indices = @transform_3, window_bounds = array<i64: 16, 32>}]} {
    %c0 = arith.constant 0 : index
    %c0_0 = arith.constant 0 : index
    %0 = vector.load %arg1[%c0, %c0_0] : memref<16x32xf32, #tpu.memory_space<vmem>>, vector<16x32xf32>
    %cst = arith.constant dense<0.000000e+00> : vector<16xf32>
    %1 = vector.multi_reduction <add>, %0, %cst [1] : vector<16x32xf32> to vector<16xf32>
    %2 = vector.shape_cast %1 : vector<16xf32> to vector<16x1xf32>
    %cst_1 = arith.constant 3.200000e+01 : f32
    %3 = vector.broadcast %cst_1 : f32 to vector<16x1xf32>
    %4 = arith.divf %2, %3 : vector<16x1xf32>
    %5 = vector.broadcast %4 : vector<16x1xf32> to vector<16x32xf32>
    %6 = arith.subf %0, %5 : vector<16x32xf32>
    %7 = arith.mulf %6, %6 : vector<16x32xf32>
    %cst_2 = arith.constant dense<0.000000e+00> : vector<16xf32>
    %8 = vector.multi_reduction <add>, %7, %cst_2 [1] : vector<16x32xf32> to vector<16xf32>
    %9 = vector.shape_cast %8 : vector<16xf32> to vector<16x1xf32>
    %cst_3 = arith.constant 3.200000e+01 : f32
    %10 = vector.broadcast %cst_3 : f32 to vector<16x1xf32>
    %11 = arith.divf %9, %10 : vector<16x1xf32>
    %12 = vector.broadcast %4 : vector<16x1xf32> to vector<16x32xf32>
    %13 = arith.subf %0, %12 : vector<16x32xf32>
    %cst_4 = arith.constant 9.99999996E-13 : f32
    %14 = vector.broadcast %cst_4 : f32 to vector<16x1xf32>
    %15 = arith.addf %11, %14 : vector<16x1xf32>
    %16 = math.rsqrt %15 : vector<16x1xf32>
    %17 = vector.broadcast %16 : vector<16x1xf32> to vector<16x32xf32>
    %18 = arith.mulf %13, %17 : vector<16x32xf32>
    %c0_5 = arith.constant 0 : index
    %c0_6 = arith.constant 0 : index
    %19 = vector.load %arg2[%c0_5, %c0_6] : memref<1x32xf32, #tpu.memory_space<vmem>>, vector<1x32xf32>
    %20 = vector.broadcast %19 : vector<1x32xf32> to vector<16x32xf32>
    %21 = arith.mulf %18, %20 : vector<16x32xf32>
    %c0_7 = arith.constant 0 : index
    %c0_8 = arith.constant 0 : index
    %22 = vector.load %arg3[%c0_7, %c0_8] : memref<1x32xf32, #tpu.memory_space<vmem>>, vector<1x32xf32>
    %23 = vector.broadcast %22 : vector<1x32xf32> to vector<16x32xf32>
    %24 = arith.addf %21, %23 : vector<16x32xf32>
    %c0_9 = arith.constant 0 : index
    %c0_10 = arith.constant 0 : index
    %25 = vector.load %arg4[%c0_9, %c0_10] : memref<16x32xf32, #tpu.memory_space<vmem>>, vector<16x32xf32>
    tpu.vector_store %arg4[%c0_9, %c0_10], %24 {strides = array<i32>} : memref<16x32xf32, #tpu.memory_space<vmem>>, vector<16x32xf32>,
    return
  }
  func.func @transform_0(%arg0: i32) -> (i32, i32) {
    %c0_i32 = arith.constant 0 : i32
    %c0_i32_0 = arith.constant 0 : i32
    return %arg0, %c0_i32 : i32, i32
  }
  func.func @transform_1(%arg0: i32) -> (i32, i32) {
    %c0_i32 = arith.constant 0 : i32
    %c0_i32_0 = arith.constant 0 : i32
    %c0_i32_1 = arith.constant 0 : i32
    return %c0_i32, %c0_i32_0 : i32, i32
  }
  func.func @transform_2(%arg0: i32) -> (i32, i32) {
    %c0_i32 = arith.constant 0 : i32
    %c0_i32_0 = arith.constant 0 : i32
    %c0_i32_1 = arith.constant 0 : i32
    return %c0_i32, %c0_i32_0 : i32, i32
  }
  func.func @transform_3(%arg0: i32) -> (i32, i32) {
    %c0_i32 = arith.constant 0 : i32
    %c0_i32_0 = arith.constant 0 : i32
    return %arg0, %c0_i32 : i32, i32
  }
}

module attributes {stable_mosaic.version = 11 : i64} {
  func.func @linear_kernel(%arg0: i32, %arg1: memref<16x32xf32, #tpu.memory_space<vmem>>, %arg2: memref<32x96xbf16, #tpu.memory_space<vmem>>, %arg3: memref<1x96xf32, #tpu.memory_space<vmem>>, %arg4: memref<16x96xf32, #tpu.memory_space<vmem>>) attributes {dimension_semantics = [#tpu.dimension_semantics<parallel>], iteration_bounds = array<i64: 1>, scalar_prefetch = 0 : i64, scratch_operands = 0 : i64, tpu.core_type = #tpu.core_type<tc>, window_params = [{transform_indices = @transform_0, window_bounds = array<i64: 16, 32>}, {pipeline_mode = #tpu.pipeline_mode<synchronous>, transform_indices = @transform_1, window_bounds = array<i64: 32, 96>}, {pipeline_mode = #tpu.pipeline_mode<synchronous>, transform_indices = @transform_2, window_bounds = array<i64: 1, 96>}, {transform_indices = @transform_3, window_bounds = array<i64: 16, 96>}]} {
    %c0 = arith.constant 0 : index
    %c0_0 = arith.constant 0 : index
    %0 = vector.load %arg1[%c0, %c0_0] : memref<16x32xf32, #tpu.memory_space<vmem>>, vector<16x32xf32>
    %1 = arith.truncf %0 : vector<16x32xf32> to vector<16x32xbf16>
    %c0_1 = arith.constant 0 : index
    %c0_2 = arith.constant 0 : index
    %2 = vector.load %arg2[%c0_1, %c0_2] : memref<32x96xbf16, #tpu.memory_space<vmem>>, vector<32x96xbf16>
    %cst = arith.constant dense<0.000000e+00> : vector<16x96xf32>
    %3 = tpu.matmul %1, %2, %cst {dimension_numbers = #tpu.dot_dimension_numbers<[1], [0], [0], [1], [0, 0, 1, 1], [], []>} : vector<16x32xbf16>, vector<32x96xbf16>, vector<16x96xf32> -> vector<16x96xf32>
    %c0_3 = arith.constant 0 : index
    %c0_4 = arith.constant 0 : index
    %4 = vector.load %arg3[%c0_3, %c0_4] : memref<1x96xf32, #tpu.memory_space<vmem>>, vector<1x96xf32>
    %5 = vector.broadcast %4 : vector<1x96xf32> to vector<16x96xf32>
    %6 = arith.addf %3, %5 : vector<16x96xf32>
    %c0_5 = arith.constant 0 : index
    %c0_6 = arith.constant 0 : index
    %7 = vector.load %arg4[%c0_5, %c0_6] : memref<16x96xf32, #tpu.memory_space<vmem>>, vector<16x96xf32>
    tpu.vector_store %arg4[%c0_5, %c0_6], %6 {strides = array<i32>} : memref<16x96xf32, #tpu.memory_space<vmem>>, vector<16x96xf32>,
    return
  }
  func.func @transform_0(%arg0: i32) -> (i32, i32) {
    %c0_i32 = arith.constant 0 : i32
    %c0_i32_0 = arith.constant 0 : i32
    return %arg0, %c0_i32 : i32, i32
  }
  func.func @transform_1(%arg0: i32) -> (i32, i32) {
    %c0_i32 = arith.constant 0 : i32
    %c0_i32_0 = arith.constant 0 : i32
    %c0_i32_1 = arith.constant 0 : i32
    return %c0_i32, %c0_i32_0 : i32, i32
  }
  func.func @transform_2(%arg0: i32) -> (i32, i32) {
    %c0_i32 = arith.constant 0 : i32
    %c0_i32_0 = arith.constant 0 : i32
    %c0_i32_1 = arith.constant 0 : i32
    return %c0_i32, %c0_i32_0 : i32, i32
  }
  func.func @transform_3(%arg0: i32) -> (i32, i32) {
    %c0_i32 = arith.constant 0 : i32
    %c0_i32_0 = arith.constant 0 : i32
    return %arg0, %c0_i32 : i32, i32
  }
}

module attributes {stable_mosaic.version = 11 : i64} {
  func.func @attn_kernel(%arg0: i32, %arg1: memref<8x96xf32, #tpu.memory_space<vmem>>, %arg2: memref<1x1x8xf32, #tpu.memory_space<vmem>>, %arg3: memref<8x32xf32, #tpu.memory_space<vmem>>) attributes {dimension_semantics = [#tpu.dimension_semantics<parallel>], iteration_bounds = array<i64: 2>, scalar_prefetch = 0 : i64, scratch_operands = 0 : i64, tpu.core_type = #tpu.core_type<tc>, window_params = [{transform_indices = @transform_0, window_bounds = array<i64: 8, 96>}, {transform_indices = @transform_1, window_bounds = array<i64: 1, 1, 8>}, {transform_indices = @transform_2, window_bounds = array<i64: 8, 32>}]} {
    %c0 = arith.constant 0 : index
    %c0_0 = arith.constant 0 : index
    %0 = vector.load %arg1[%c0, %c0_0] : memref<8x96xf32, #tpu.memory_space<vmem>>, vector<8x96xf32>
    %c0_1 = arith.constant 0 : index
    %c0_2 = arith.constant 0 : index
    %c0_3 = arith.constant 0 : index
    %1 = vector.load %arg2[%c0_1, %c0_2, %c0_3] : memref<1x1x8xf32, #tpu.memory_space<vmem>>, vector<1x1x8xf32>
    %2 = vector.shape_cast %1 : vector<1x1x8xf32> to vector<1x8xf32>
    %3 = vector.extract_strided_slice %0 {offsets = [0, 0], sizes = [8, 8], strides = [1, 1]} : vector<8x96xf32> to vector<8x8xf32>
    %4 = arith.truncf %3 : vector<8x8xf32> to vector<8x8xbf16>
    %5 = vector.extract_strided_slice %0 {offsets = [0, 32], sizes = [8, 8], strides = [1, 1]} : vector<8x96xf32> to vector<8x8xf32>
    %6 = arith.truncf %5 : vector<8x8xf32> to vector<8x8xbf16>
    %7 = vector.extract_strided_slice %0 {offsets = [0, 64], sizes = [8, 8], strides = [1, 1]} : vector<8x96xf32> to vector<8x8xf32>
    %8 = arith.truncf %7 : vector<8x8xf32> to vector<8x8xbf16>
    %cst = arith.constant dense<0.000000e+00> : vector<8x8xf32>
    %9 = tpu.matmul %4, %6, %cst {dimension_numbers = #tpu.dot_dimension_numbers<[1], [1], [0], [0], [0, 0, 1, 0], [], []>} : vector<8x8xbf16>, vector<8x8xbf16>, vector<8x8xf32> -> vector<8x8xf32>
    %cst_4 = arith.constant 0.353553385 : f32
    %10 = vector.broadcast %cst_4 : f32 to vector<8x8xf32>
    %11 = arith.mulf %9, %10 : vector<8x8xf32>
    %12 = vector.broadcast %2 : vector<1x8xf32> to vector<8x8xf32>
    %13 = arith.addf %11, %12 : vector<8x8xf32>
    %cst_5 = arith.constant dense<0xFF800000> : vector<8xf32>
    %14 = vector.multi_reduction <maximumf>, %13, %cst_5 [1] : vector<8x8xf32> to vector<8xf32>
    %15 = vector.shape_cast %14 : vector<8xf32> to vector<8x1xf32>
    %16 = vector.broadcast %15 : vector<8x1xf32> to vector<8x8xf32>
    %17 = arith.subf %13, %16 : vector<8x8xf32>
    %18 = math.exp %17 : vector<8x8xf32>
    %cst_6 = arith.constant dense<0.000000e+00> : vector<8xf32>
    %19 = vector.multi_reduction <add>, %18, %cst_6 [1] : vector<8x8xf32> to vector<8xf32>
    %20 = vector.shape_cast %19 : vector<8xf32> to vector<8x1xf32>
    %21 = tpu.reciprocal %20 {approx = true} : vector<8x1xf32> -> vector<8x1xf32>
    %22 = vector.broadcast %21 : vector<8x1xf32> to vector<8x8xf32>
    %23 = arith.mulf %18, %22 : vector<8x8xf32>
    %24 = arith.truncf %23 : vector<8x8xf32> to vector<8x8xbf16>
    %cst_7 = arith.constant dense<0.000000e+00> : vector<8x8xf32>
    %25 = tpu.matmul %24, %8, %cst_7 {dimension_numbers = #tpu.dot_dimension_numbers<[1], [0], [0], [1], [0, 0, 1, 1], [], []>} : vector<8x8xbf16>, vector<8x8xbf16>, vector<8x8xf32> -> vector<8x8xf32>
    %26 = vector.extract_strided_slice %0 {offsets = [0, 8], sizes = [8, 8], strides = [1, 1]} : vector<8x96xf32> to vector<8x8xf32>
    %27 = arith.truncf %26 : vector<8x8xf32> to vector<8x8xbf16>
    %28 = vector.extract_strided_slice %0 {offsets = [0, 40], sizes = [8, 8], strides = [1, 1]} : vector<8x96xf32> to vector<8x8xf32>
    %29 = arith.truncf %28 : vector<8x8xf32> to vector<8x8xbf16>
    %30 = vector.extract_strided_slice %0 {offsets = [0, 72], sizes = [8, 8], strides = [1, 1]} : vector<8x96xf32> to vector<8x8xf32>
    %31 = arith.truncf %30 : vector<8x8xf32> to vector<8x8xbf16>
    %cst_8 = arith.constant dense<0.000000e+00> : vector<8x8xf32>
    %32 = tpu.matmul %27, %29, %cst_8 {dimension_numbers = #tpu.dot_dimension_numbers<[1], [1], [0], [0], [0, 0, 1, 0], [], []>} : vector<8x8xbf16>, vector<8x8xbf16>, vector<8x8xf32> -> vector<8x8xf32>
    %cst_9 = arith.constant 0.353553385 : f32
    %33 = vector.broadcast %cst_9 : f32 to vector<8x8xf32>
    %34 = arith.mulf %32, %33 : vector<8x8xf32>
    %35 = vector.broadcast %2 : vector<1x8xf32> to vector<8x8xf32>
    %36 = arith.addf %34, %35 : vector<8x8xf32>
    %cst_10 = arith.constant dense<0xFF800000> : vector<8xf32>
    %37 = vector.multi_reduction <maximumf>, %36, %cst_10 [1] : vector<8x8xf32> to vector<8xf32>
    %38 = vector.shape_cast %37 : vector<8xf32> to vector<8x1xf32>
    %39 = vector.broadcast %38 : vector<8x1xf32> to vector<8x8xf32>
    %40 = arith.subf %36, %39 : vector<8x8xf32>
    %41 = math.exp %40 : vector<8x8xf32>
    %cst_11 = arith.constant dense<0.000000e+00> : vector<8xf32>
    %42 = vector.multi_reduction <add>, %41, %cst_11 [1] : vector<8x8xf32> to vector<8xf32>
    %43 = vector.shape_cast %42 : vector<8xf32> to vector<8x1xf32>
    %44 = tpu.reciprocal %43 {approx = true} : vector<8x1xf32> -> vector<8x1xf32>
    %45 = vector.broadcast %44 : vector<8x1xf32> to vector<8x8xf32>
    %46 = arith.mulf %41, %45 : vector<8x8xf32>
    %47 = arith.truncf %46 : vector<8x8xf32> to vector<8x8xbf16>
    %cst_12 = arith.constant dense<0.000000e+00> : vector<8x8xf32>
    %48 = tpu.matmul %47, %31, %cst_12 {dimension_numbers = #tpu.dot_dimension_numbers<[1], [0], [0], [1], [0, 0, 1, 1], [], []>} : vector<8x8xbf16>, vector<8x8xbf16>, vector<8x8xf32> -> vector<8x8xf32>
    %49 = vector.extract_strided_slice %0 {offsets = [0, 16], sizes = [8, 8], strides = [1, 1]} : vector<8x96xf32> to vector<8x8xf32>
    %50 = arith.truncf %49 : vector<8x8xf32> to vector<8x8xbf16>
    %51 = vector.extract_strided_slice %0 {offsets = [0, 48], sizes = [8, 8], strides = [1, 1]} : vector<8x96xf32> to vector<8x8xf32>
    %52 = arith.truncf %51 : vector<8x8xf32> to vector<8x8xbf16>
    %53 = vector.extract_strided_slice %0 {offsets = [0, 80], sizes = [8, 8], strides = [1, 1]} : vector<8x96xf32> to vector<8x8xf32>
    %54 = arith.truncf %53 : vector<8x8xf32> to vector<8x8xbf16>
    %cst_13 = arith.constant dense<0.000000e+00> : vector<8x8xf32>
    %55 = tpu.matmul %50, %52, %cst_13 {dimension_numbers = #tpu.dot_dimension_numbers<[1], [1], [0], [0], [0, 0, 1, 0], [], []>} : vector<8x8xbf16>, vector<8x8xbf16>, vector<8x8xf32> -> vector<8x8xf32>
    %cst_14 = arith.constant 0.353553385 : f32
    %56 = vector.broadcast %cst_14 : f32 to vector<8x8xf32>
    %57 = arith.mulf %55, %56 : vector<8x8xf32>
    %58 = vector.broadcast %2 : vector<1x8xf32> to vector<8x8xf32>
    %59 = arith.addf %57, %58 : vector<8x8xf32>
    %cst_15 = arith.constant dense<0xFF800000> : vector<8xf32>
    %60 = vector.multi_reduction <maximumf>, %59, %cst_15 [1] : vector<8x8xf32> to vector<8xf32>
    %61 = vector.shape_cast %60 : vector<8xf32> to vector<8x1xf32>
    %62 = vector.broadcast %61 : vector<8x1xf32> to vector<8x8xf32>
    %63 = arith.subf %59, %62 : vector<8x8xf32>
    %64 = math.exp %63 : vector<8x8xf32>
    %cst_16 = arith.constant dense<0.000000e+00> : vector<8xf32>
    %65 = vector.multi_reduction <add>, %64, %cst_16 [1] : vector<8x8xf32> to vector<8xf32>
    %66 = vector.shape_cast %65 : vector<8xf32> to vector<8x1xf32>
    %67 = tpu.reciprocal %66 {approx = true} : vector<8x1xf32> -> vector<8x1xf32>
    %68 = vector.broadcast %67 : vector<8x1xf32> to vector<8x8xf32>
    %69 = arith.mulf %64, %68 : vector<8x8xf32>
    %70 = arith.truncf %69 : vector<8x8xf32> to vector<8x8xbf16>
    %cst_17 = arith.constant dense<0.000000e+00> : vector<8x8xf32>
    %71 = tpu.matmul %70, %54, %cst_17 {dimension_numbers = #tpu.dot_dimension_numbers<[1], [0], [0], [1], [0, 0, 1, 1], [], []>} : vector<8x8xbf16>, vector<8x8xbf16>, vector<8x8xf32> -> vector<8x8xf32>
    %72 = vector.extract_strided_slice %0 {offsets = [0, 24], sizes = [8, 8], strides = [1, 1]} : vector<8x96xf32> to vector<8x8xf32>
    %73 = arith.truncf %72 : vector<8x8xf32> to vector<8x8xbf16>
    %74 = vector.extract_strided_slice %0 {offsets = [0, 56], sizes = [8, 8], strides = [1, 1]} : vector<8x96xf32> to vector<8x8xf32>
    %75 = arith.truncf %74 : vector<8x8xf32> to vector<8x8xbf16>
    %76 = vector.extract_strided_slice %0 {offsets = [0, 88], sizes = [8, 8], strides = [1, 1]} : vector<8x96xf32> to vector<8x8xf32>
    %77 = arith.truncf %76 : vector<8x8xf32> to vector<8x8xbf16>
    %cst_18 = arith.constant dense<0.000000e+00> : vector<8x8xf32>
    %78 = tpu.matmul %73, %75, %cst_18 {dimension_numbers = #tpu.dot_dimension_numbers<[1], [1], [0], [0], [0, 0, 1, 0], [], []>} : vector<8x8xbf16>, vector<8x8xbf16>, vector<8x8xf32> -> vector<8x8xf32>
    %cst_19 = arith.constant 0.353553385 : f32
    %79 = vector.broadcast %cst_19 : f32 to vector<8x8xf32>
    %80 = arith.mulf %78, %79 : vector<8x8xf32>
    %81 = vector.broadcast %2 : vector<1x8xf32> to vector<8x8xf32>
    %82 = arith.addf %80, %81 : vector<8x8xf32>
    %cst_20 = arith.constant dense<0xFF800000> : vector<8xf32>
    %83 = vector.multi_reduction <maximumf>, %82, %cst_20 [1] : vector<8x8xf32> to vector<8xf32>
    %84 = vector.shape_cast %83 : vector<8xf32> to vector<8x1xf32>
    %85 = vector.broadcast %84 : vector<8x1xf32> to vector<8x8xf32>
    %86 = arith.subf %82, %85 : vector<8x8xf32>
    %87 = math.exp %86 : vector<8x8xf32>
    %cst_21 = arith.constant dense<0.000000e+00> : vector<8xf32>
    %88 = vector.multi_reduction <add>, %87, %cst_21 [1] : vector<8x8xf32> to vector<8xf32>
    %89 = vector.shape_cast %88 : vector<8xf32> to vector<8x1xf32>
    %90 = tpu.reciprocal %89 {approx = true} : vector<8x1xf32> -> vector<8x1xf32>
    %91 = vector.broadcast %90 : vector<8x1xf32> to vector<8x8xf32>
    %92 = arith.mulf %87, %91 : vector<8x8xf32>
    %93 = arith.truncf %92 : vector<8x8xf32> to vector<8x8xbf16>
    %cst_22 = arith.constant dense<0.000000e+00> : vector<8x8xf32>
    %94 = tpu.matmul %93, %77, %cst_22 {dimension_numbers = #tpu.dot_dimension_numbers<[1], [0], [0], [1], [0, 0, 1, 1], [], []>} : vector<8x8xbf16>, vector<8x8xbf16>, vector<8x8xf32> -> vector<8x8xf32>
    %95 = tpu.concatenate %25, %48, %71, %94 in 1 : vector<8x8xf32>, vector<8x8xf32>, vector<8x8xf32>, vector<8x8xf32> -> vector<8x32xf32>
    %c0_23 = arith.constant 0 : index
    %c0_24 = arith.constant 0 : index
    %96 = vector.load %arg3[%c0_23, %c0_24] : memref<8x32xf32, #tpu.memory_space<vmem>>, vector<8x32xf32>
    tpu.vector_store %arg3[%c0_23, %c0_24], %95 {strides = array<i32>} : memref<8x32xf32, #tpu.memory_space<vmem>>, vector<8x32xf32>,
    return
  }
  func.func @transform_0(%arg0: i32) -> (i32, i32) {
    %c0_i32 = arith.constant 0 : i32
    %c0_i32_0 = arith.constant 0 : i32
    return %arg0, %c0_i32 : i32, i32
  }
  func.func @transform_1(%arg0: i32) -> (i32, i32, i32) {
    %c0_i32 = arith.constant 0 : i32
    %c0_i32_0 = arith.constant 0 : i32
    %c0_i32_1 = arith.constant 0 : i32
    return %arg0, %c0_i32, %c0_i32_0 : i32, i32, i32
  }
  func.func @transform_2(%arg0: i32) -> (i32, i32) {
    %c0_i32 = arith.constant 0 : i32
    %c0_i32_0 = arith.constant 0 : i32
    return %arg0, %c0_i32 : i32, i32
  }
}

module attributes {stable_mosaic.version = 11 : i64} {
  func.func @linear_add_ln_kernel(%arg0: i32, %arg1: memref<16x64xf32, #tpu.memory_space<vmem>>, %arg2: memref<64x32xbf16, #tpu.memory_space<vmem>>, %arg3: memref<1x32xf32, #tpu.memory_space<vmem>>, %arg4: memref<16x32xf32, #tpu.memory_space<vmem>>, %arg5: memref<1x32xf32, #tpu.memory_space<vmem>>, %arg6: memref<1x32xf32, #tpu.memory_space<vmem>>, %arg7: memref<16x32xf32, #tpu.memory_space<vmem>>) attributes {dimension_semantics = [#tpu.dimension_semantics<parallel>], iteration_bounds = array<i64: 1>, scalar_prefetch = 0 : i64, scratch_operands = 0 : i64, tpu.core_type = #tpu.core_type<tc>, window_params = [{transform_indices = @transform_0, window_bounds = array<i64: 16, 64>}, {pipeline_mode = #tpu.pipeline_mode<synchronous>, transform_indices = @transform_1, window_bounds = array<i64: 64, 32>}, {pipeline_mode = #tpu.pipeline_mode<synchronous>, transform_indices = @transform_2, window_bounds = array<i64: 1, 32>}, {transform_indices = @transform_3, window_bounds = array<i64: 16, 32>}, {pipeline_mode = #tpu.pipeline_mode<synchronous>, transform_indices = @transform_4, window_bounds = array<i64: 1, 32>}, {pipeline_mode = #tpu.pipeline_mode<synchronous>, transform_indices = @transform_5, window_bounds = array<i64: 1, 32>}, {transform_indices = @transform_6, window_bounds = array<i64: 16, 32>}]} {
    %c0 = arith.constant 0 : index
    %c0_0 = arith.constant 0 : index
    %0 = vector.load %arg1[%c0, %c0_0] : memref<16x64xf32, #tpu.memory_space<vmem>>, vector<16x64xf32>
    %1 = arith.truncf %0 : vector<16x64xf32> to vector<16x64xbf16>
    %c0_1 = arith.constant 0 : index
    %c0_2 = arith.constant 0 : index
    %2 = vector.load %arg2[%c0_1, %c0_2] : memref<64x32xbf16, #tpu.memory_space<vmem>>, vector<64x32xbf16>
    %cst = arith.constant dense<0.000000e+00> : vector<16x32xf32>
    %3 = tpu.matmul %1, %2, %cst {dimension_numbers = #tpu.dot_dimension_numbers<[1], [0], [0], [1], [0, 0, 1, 1], [], []>} : vector<16x64xbf16>, vector<64x32xbf16>, vector<16x32xf32> -> vector<16x32xf32>
    %c0_3 = arith.constant 0 : index
    %c0_4 = arith.constant 0 : index
    %4 = vector.load %arg3[%c0_3, %c0_4] : memref<1x32xf32, #tpu.memory_space<vmem>>, vector<1x32xf32>
    %5 = vector.broadcast %4 : vector<1x32xf32> to vector<16x32xf32>
    %6 = arith.addf %3, %5 : vector<16x32xf32>
    %c0_5 = arith.constant 0 : index
    %c0_6 = arith.constant 0 : index
    %7 = vector.load %arg4[%c0_5, %c0_6] : memref<16x32xf32, #tpu.memory_space<vmem>>, vector<16x32xf32>
    %8 = arith.addf %6, %7 : vector<16x32xf32>
    %cst_7 = arith.constant dense<0.000000e+00> : vector<16xf32>
    %9 = vector.multi_reduction <add>, %8, %cst_7 [1] : vector<16x32xf32> to vector<16xf32>
    %10 = vector.shape_cast %9 : vector<16xf32> to vector<16x1xf32>
    %cst_8 = arith.constant 3.200000e+01 : f32
    %11 = vector.broadcast %cst_8 : f32 to vector<16x1xf32>
    %12 = arith.divf %10, %11 : vector<16x1xf32>
    %13 = vector.broadcast %12 : vector<16x1xf32> to vector<16x32xf32>
    %14 = arith.subf %8, %13 : vector<16x32xf32>
    %15 = arith.mulf %14, %14 : vector<16x32xf32>
    %cst_9 = arith.constant dense<0.000000e+00> : vector<16xf32>
    %16 = vector.multi_reduction <add>, %15, %cst_9 [1] : vector<16x32xf32> to vector<16xf32>
    %17 = vector.shape_cast %16 : vector<16xf32> to vector<16x1xf32>
    %cst_10 = arith.constant 3.200000e+01 : f32
    %18 = vector.broadcast %cst_10 : f32 to vector<16x1xf32>
    %19 = arith.divf %17, %18 : vector<16x1xf32>
    %20 = vector.broadcast %12 : vector<16x1xf32> to vector<16x32xf32>
    %21 = arith.subf %8, %20 : vector<16x32xf32>
    %cst_11 = arith.constant 9.99999996E-13 : f32
    %22 = vector.broadcast %cst_11 : f32 to vector<16x1xf32>
    %23 = arith.addf %19, %22 : vector<16x1xf32>
    %24 = math.rsqrt %23 : vector<16x1xf32>
    %25 = vector.broadcast %24 : vector<16x1xf32> to vector<16x32xf32>
    %26 = arith.mulf %21, %25 : vector<16x32xf32>
    %c0_12 = arith.constant 0 : index
    %c0_13 = arith.constant 0 : index
    %27 = vector.load %arg5[%c0_12, %c0_13] : memref<1x32xf32, #tpu.memory_space<vmem>>, vector<1x32xf32>
    %28 = vector.broadcast %27 : vector<1x32xf32> to vector<16x32xf32>
    %29 = arith.mulf %26, %28 : vector<16x32xf32>
    %c0_14 = arith.constant 0 : index
    %c0_15 = arith.constant 0 : index
    %30 = vector.load %arg6[%c0_14, %c0_15] : memref<1x32xf32, #tpu.memory_space<vmem>>, vector<1x32xf32>
    %31 = vector.broadcast %30 : vector<1x32xf32> to vector<16x32xf32>
    %32 = arith.addf %29, %31 : vector<16x32xf32>
    %c0_16 = arith.constant 0 : index
    %c0_17 = arith.constant 0 : index
    %33 = vector.load %arg7[%c0_16, %c0_17] : memref<16x32xf32, #tpu.memory_space<vmem>>, vector<16x32xf32>
    tpu.vector_store %arg7[%c0_16, %c0_17], %32 {strides = array<i32>} : memref<16x32xf32, #tpu.memory_space<vmem>>, vector<16x32xf32>,
    return
  }
  func.func @transform_0(%arg0: i32) -> (i32, i32) {
    %c0_i32 = arith.constant 0 : i32
    %c0_i32_0 = arith.constant 0 : i32
    return %arg0, %c0_i32 : i32, i32
  }
  func.func @transform_1(%arg0: i32) -> (i32, i32) {
    %c0_i32 = arith.constant 0 : i32
    %c0_i32_0 = arith.constant 0 : i32
    %c0_i32_1 = arith.constant 0 : i32
    return %c0_i32, %c0_i32_0 : i32, i32
  }
  func.func @transform_2(%arg0: i32) -> (i32, i32) {
    %c0_i32 = arith.constant 0 : i32
    %c0_i32_0 = arith.constant 0 : i32
    %c0_i32_1 = arith.constant 0 : i32
    return %c0_i32, %c0_i32_0 : i32, i32
  }
  func.func @transform_3(%arg0: i32) -> (i32, i32) {
    %c0_i32 = arith.constant 0 : i32
    %c0_i32_0 = arith.constant 0 : i32
    return %arg0, %c0_i32 : i32, i32
  }
  func.func @transform_4(%arg0: i32) -> (i32, i32) {
    %c0_i32 = arith.constant 0 : i32
    %c0_i32_0 = arith.constant 0 : i32
    %c0_i32_1 = arith.constant 0 : i32
    return %c0_i32, %c0_i32_0 : i32, i32
  }
  func.func @transform_5(%arg0: i32) -> (i32, i32) {
    %c0_i32 = arith.constant 0 : i32
    %c0_i32_0 = arith.constant 0 : i32
    %c0_i32_1 = arith.constant 0 : i32
    return %c0_i32, %c0_i32_0 : i32, i32
  }
  func.func @transform_6(%arg0: i32) -> (i32, i32) {
    %c0_i32 = arith.constant 0 : i32
    %c0_i32_0 = arith.constant 0 : i32
    return %arg0, %c0_i32 : i32, i32
  }
}

module attributes {stable_mosaic.version = 11 : i64} {
  func.func @linear_gelu_kernel(%arg0: i32, %arg1: memref<16x32xf32, #tpu.memory_space<vmem>>, %arg2: memref<32x64xbf16, #tpu.memory_space<vmem>>, %arg3: memref<1x64xf32, #tpu.memory_space<vmem>>, %arg4: memref<16x64xf32, #tpu.memory_space<vmem>>) attributes {dimension_semantics = [#tpu.dimension_semantics<parallel>], iteration_bounds = array<i64: 1>, scalar_prefetch = 0 : i64, scratch_operands = 0 : i64, tpu.core_type = #tpu.core_type<tc>, window_params = [{transform_indices = @transform_0, window_bounds = array<i64: 16, 32>}, {pipeline_mode = #tpu.pipeline_mode<synchronous>, transform_indices = @transform_1, window_bounds = array<i64: 32, 64>}, {pipeline_mode = #tpu.pipeline_mode<synchronous>, transform_indices = @transform_2, window_bounds = array<i64: 1, 64>}, {transform_indices = @transform_3, window_bounds = array<i64: 16, 64>}]} {
    %c0 = arith.constant 0 : index
    %c0_0 = arith.constant 0 : index
    %0 = vector.load %arg1[%c0, %c0_0] : memref<16x32xf32, #tpu.memory_space<vmem>>, vector<16x32xf32>
    %1 = arith.truncf %0 : vector<16x32xf32> to vector<16x32xbf16>
    %c0_1 = arith.constant 0 : index
    %c0_2 = arith.constant 0 : index
    %2 = vector.load %arg2[%c0_1, %c0_2] : memref<32x64xbf16, #tpu.memory_space<vmem>>, vector<32x64xbf16>
    %cst = arith.constant dense<0.000000e+00> : vector<16x64xf32>
    %3 = tpu.matmul %1, %2, %cst {dimension_numbers = #tpu.dot_dimension_numbers<[1], [0], [0], [1], [0, 0, 1, 1], [], []>} : vector<16x32xbf16>, vector<32x64xbf16>, vector<16x64xf32> -> vector<16x64xf32>
    %c0_3 = arith.constant 0 : index
    %c0_4 = arith.constant 0 : index
    %4 = vector.load %arg3[%c0_3, %c0_4] : memref<1x64xf32, #tpu.memory_space<vmem>>, vector<1x64xf32>
    %5 = vector.broadcast %4 : vector<1x64xf32> to vector<16x64xf32>
    %6 = arith.addf %3, %5 : vector<16x64xf32>
    %cst_5 = arith.constant 5.000000e-01 : f32
    %7 = vector.broadcast %cst_5 : f32 to vector<16x64xf32>
    %8 = arith.mulf %7, %6 : vector<16x64xf32>
    %cst_6 = arith.constant 4.471500e-02 : f32
    %9 = vector.broadcast %cst_6 : f32 to vector<16x64xf32>
    %10 = arith.mulf %9, %6 : vector<16x64xf32>
    %11 = arith.mulf %10, %6 : vector<16x64xf32>
    %12 = arith.mulf %11, %6 : vector<16x64xf32>
    %13 = arith.addf %6, %12 : vector<16x64xf32>
    %cst_7 = arith.constant 0.797884583 : f32
    %14 = vector.broadcast %cst_7 : f32 to vector<16x64xf32>
    %15 = arith.mulf %14, %13 : vector<16x64xf32>
    %16 = math.tanh %15 : vector<16x64xf32>
    %cst_8 = arith.constant 1.000000e+00 : f32
    %17 = vector.broadcast %cst_8 : f32 to vector<16x64xf32>
    %18 = arith.addf %17, %16 : vector<16x64xf32>
    %19 = arith.mulf %8, %18 : vector<16x64xf32>
    %c0_9 = arith.constant 0 : index
    %c0_10 = arith.constant 0 : index
    %20 = vector.load %arg4[%c0_9, %c0_10] : memref<16x64xf32, #tpu.memory_space<vmem>>, vector<16x64xf32>
    tpu.vector_store %arg4[%c0_9, %c0_10], %19 {strides = array<i32>} : memref<16x64xf32, #tpu.memory_space<vmem>>, vector<16x64xf32>,
    return
  }
  func.func @transform_0(%arg0: i32) -> (i32, i32) {
    %c0_i32 = arith.constant 0 : i32
    %c0_i32_0 = arith.constant 0 : i32
    return %arg0, %c0_i32 : i32, i32
  }
  func.func @transform_1(%arg0: i32) -> (i32, i32) {
    %c0_i32 = arith.constant 0 : i32
    %c0_i32_0 = arith.constant 0 : i32
    %c0_i32_1 = arith.constant 0 : i32
    return %c0_i32, %c0_i32_0 : i32, i32
  }
  func.func @transform_2(%arg0: i32) -> (i32, i32) {
    %c0_i32 = arith.constant 0 : i32
    %c0_i32_0 = arith.constant 0 : i32
    %c0_i32_1 = arith.constant 0 : i32
    return %c0_i32, %c0_i32_0 : i32, i32
  }
  func.func @transform_3(%arg0: i32) -> (i32, i32) {
    %c0_i32 = arith.constant 0 : i32
    %c0_i32_0 = arith.constant 0 : i32
    return %arg0, %c0_i32 : i32, i32
  }
}

module attributes {stable_mosaic.version = 11 : i64} {
  func.func @linear_kernel(%arg0: i32, %arg1: memref<2x32xf32, #tpu.memory_space<vmem>>, %arg2: memref<32x4xbf16, #tpu.memory_space<vmem>>, %arg3: memref<1x4xf32, #tpu.memory_space<vmem>>, %arg4: memref<2x4xf32, #tpu.memory_space<vmem>>) attributes {dimension_semantics = [#tpu.dimension_semantics<parallel>], iteration_bounds = array<i64: 1>, scalar_prefetch = 0 : i64, scratch_operands = 0 : i64, tpu.core_type = #tpu.core_type<tc>, window_params = [{transform_indices = @transform_0, window_bounds = array<i64: 2, 32>}, {pipeline_mode = #tpu.pipeline_mode<synchronous>, transform_indices = @transform_1, window_bounds = array<i64: 32, 4>}, {pipeline_mode = #tpu.pipeline_mode<synchronous>, transform_indices = @transform_2, window_bounds = array<i64: 1, 4>}, {transform_indices = @transform_3, window_bounds = array<i64: 2, 4>}]} {
    %c0 = arith.constant 0 : index
    %c0_0 = arith.constant 0 : index
    %0 = vector.load %arg1[%c0, %c0_0] : memref<2x32xf32, #tpu.memory_space<vmem>>, vector<2x32xf32>
    %1 = arith.truncf %0 : vector<2x32xf32> to vector<2x32xbf16>
    %c0_1 = arith.constant 0 : index
    %c0_2 = arith.constant 0 : index
    %2 = vector.load %arg2[%c0_1, %c0_2] : memref<32x4xbf16, #tpu.memory_space<vmem>>, vector<32x4xbf16>
    %cst = arith.constant dense<0.000000e+00> : vector<2x4xf32>
    %3 = tpu.matmul %1, %2, %cst {dimension_numbers = #tpu.dot_dimension_numbers<[1], [0], [0], [1], [0, 0, 1, 1], [], []>} : vector<2x32xbf16>, vector<32x4xbf16>, vector<2x4xf32> -> vector<2x4xf32>
    %c0_3 = arith.constant 0 : index
    %c0_4 = arith.constant 0 : index
    %4 = vector.load %arg3[%c0_3, %c0_4] : memref<1x4xf32, #tpu.memory_space<vmem>>, vector<1x4xf32>
    %5 = vector.broadcast %4 : vector<1x4xf32> to vector<2x4xf32>
    %6 = arith.addf %3, %5 : vector<2x4xf32>
    %c0_5 = arith.constant 0 : index
    %c0_6 = arith.constant 0 : index
    %7 = vector.load %arg4[%c0_5, %c0_6] : memref<2x4xf32, #tpu.memory_space<vmem>>, vector<2x4xf32>
    tpu.vector_store %arg4[%c0_5, %c0_6], %6 {strides = array<i32>} : memref<2x4xf32, #tpu.memory_space<vmem>>, vector<2x4xf32>,
    return
  }
  func.func @transform_0(%arg0: i32) -> (i32, i32) {
    %c0_i32 = arith.constant 0 : i32
    %c0_i32_0 = arith.constant 0 : i32
    return %arg0, %c0_i32 : i32, i32
  }
  func.func @transform_1(%arg0: i32) -> (i32, i32) {
    %c0_i32 = arith.constant 0 : i32
    %c0_i32_0 = arith.constant 0 : i32
    %c0_i32_1 = arith.constant 0 : i32
    return %c0_i32, %c0_i32_0 : i32, i32
  }
  func.func @transform_2(%arg0: i32) -> (i32, i32) {
    %c0_i32 = arith.constant 0 : i32
    %c0_i32_0 = arith.constant 0 : i32
    %c0_i32_1 = arith.constant 0 : i32
    return %c0_i32, %c0_i32_0 : i32, i32
  }
  func.func @transform_3(%arg0: i32) -> (i32, i32) {
    %c0_i32 = arith.constant 0 : i32
    %c0_i32_0 = arith.constant 0 : i32
    return %arg0, %c0_i32 : i32, i32
  }
}

</mosaic_0001>

<llo_original>
// kernel: distilbert_forward.13
$region0: #{distilbert_forward.13}
  #allocation0 [shape = 'u32[]', space=smem, size = 0x4, offset = 0x4, fixed_abs, tag = 'smem constant byte address 0x4 - core index']
  #allocation1 [shape = 'u32[72,128]{1,0:T(1,128)}', space=vmem, size = 0x9000, scoped, tag = 'internal scratch']
  %s0 = inlined_call_operand.vmem [shape: f32[16,32], index: 0, kind: input, shape index: {}]
  %s1 = inlined_call_operand.vmem [shape: bf16[32,96], index: 1, kind: input, shape index: {}]
  %s2 = inlined_call_operand.vmem [shape: f32[1,96], index: 2, kind: input, shape index: {}]
  %s3 = inlined_call_operand.vmem [shape: f32[16,96], index: 3, kind: output, shape index: {}]
  %s4 = sld [smem:[#allocation0]]
  $region22: #{distilbert_forward.13} parent=0
    _
  %s6 = ssub.s32 1, %s4
  %s7 = scalar_select 0, %s6, %s4
  // Predicated region
  $region2: #{distilbert_forward.13} parent=0 // pred_check
    _
  $region3: #{distilbert_forward.13} parent=0 // pred_check_branch
    %9 = sbr.rel (0) target = $region5
  $region4: #{distilbert_forward.13} parent=0 // pred_region
    _
  $region5: #{distilbert_forward.13} parent=0 // pred_fallthru
    _
  // Predicated region
  $region6: #{distilbert_forward.13} parent=0 // pred_check
    _
  $region7: #{distilbert_forward.13} parent=0 // pred_check_branch
    %11 = sbr.rel (0) target = $region9
  $region8: #{distilbert_forward.13} parent=0 // pred_region
    _
  $region9: #{distilbert_forward.13} parent=0 // pred_fallthru
    _
  // Predicated region
  $region10: #{distilbert_forward.13} parent=0 // pred_check
    _
  $region11: #{distilbert_forward.13} parent=0 // pred_check_branch
    %13 = sbr.rel (0) target = $region13
  $region12: #{distilbert_forward.13} parent=0 // pred_region
    _
  $region13: #{distilbert_forward.13} parent=0 // pred_fallthru
    _
  %v15 = vld [vmem:[%s0] sm:$0xff]
  %v16 = vld [vmem:[%s0 + $0x8] sm:$0xff]
  %v17 = vpack.c.bf16 %v16, %v15
  %v18 = vld [vmem:[%s1] sm:$0xf]
  %v19 = vld [vmem:[%s1 + $0x4] sm:$0xf]
  %v20 = vld [vmem:[%s1 + $0x8] sm:$0xf]
  %v21 = vld [vmem:[%s1 + $0xc] sm:$0xf]
  %v22 = vld [vmem:[%s2] sm:$0x1]
  %v24 = vperm.slane %v22, 0
  %v30 = vunpack.c.l.b16 %v18
  %v31 = vunpack.c.l.b16 %v19
  %v32 = vunpack.c.l.b16 %v20
  %v33 = vunpack.c.l.b16 %v21
  %v34 = vpack.c.b16 %v31, %v30
  %v35 = vpack.c.b16 %v33, %v32
  %vm38 = vcmask 261120
  %v40 = vsel %vm38, %v17, 0
  %42 = vmatpush.bf16.msra.mxu0 0
  %43 = vmatpush.bf16.msra.mxu0 0
  %44 = vmatpush.bf16.msra.mxu0 0
  %45 = vmatpush.bf16.msra.mxu0 0
  %46 = vmatpush.bf16.msra.mxu0 0
  %47 = vmatpush.bf16.msra.mxu0 0
  %48 = vmatpush.bf16.msra.mxu0 %v35
  %49 = vmatpush.bf16.msra.mxu0 %v34
  %50 = vmatmul.bf16.gmra.mxu0 %v40
  %v51 = vpop.f32.mrf.mxu0
  %v52 = vadd.f32 %v24, %v51
  %v53 = vpop.f32.mrf.mxu0
  %v54 = vadd.f32 %v24, %v53
  %55 = vdwg.mxu0
  %vm56 = vcmask 785408
  %57 = vst.msk [vmem:[%s3] sm:$0xff] %vm56, %v52
  %58 = vst.msk [vmem:[%s3 + $0x8] sm:$0xff] %vm56, %v54
  // Predicated region
  $region14: #{distilbert_forward.13} parent=0 // pred_check
    _
  $region15: #{distilbert_forward.13} parent=0 // pred_check_branch
    %60 = sbr.rel (0) target = $region17
  $region16: #{distilbert_forward.13} parent=0 // pred_region
    _
  $region17: #{distilbert_forward.13} parent=0 // pred_fallthru
    _
  // Predicated region
  $region18: #{distilbert_forward.13} parent=0 // pred_check
    _
  $region19: #{distilbert_forward.13} parent=0 // pred_check_branch
    %62 = sbr.rel (0) target = $region21
  $region20: #{distilbert_forward.13} parent=0 // pred_region
    _
  $region21: #{distilbert_forward.13} parent=0 // pred_fallthru
    _

// kernel: distilbert_forward.12
$region0: #{distilbert_forward.12}
  #allocation0 [shape = 'u32[]', space=smem, size = 0x4, offset = 0x4, fixed_abs, tag = 'smem constant byte address 0x4 - core index']
  #allocation1 [shape = 'u32[72,128]{1,0:T(1,128)}', space=vmem, size = 0x9000, scoped, tag = 'internal scratch']
  %s0 = inlined_call_operand.vmem [shape: f32[16,32], index: 0, kind: input, shape index: {}]
  %s1 = inlined_call_operand.vmem [shape: f32[1,32], index: 1, kind: input, shape index: {}]
  %s2 = inlined_call_operand.vmem [shape: f32[1,32], index: 2, kind: input, shape index: {}]
  %s3 = inlined_call_operand.vmem [shape: f32[16,32], index: 3, kind: output, shape index: {}]
  %s4 = sld [smem:[#allocation0]]
  $region22: #{distilbert_forward.12} parent=0
    _
  %s6 = ssub.s32 1, %s4
  %s7 = scalar_select 0, %s6, %s4
  // Predicated region
  $region2: #{distilbert_forward.12} parent=0 // pred_check
    _
  $region3: #{distilbert_forward.12} parent=0 // pred_check_branch
    %9 = sbr.rel (0) target = $region5
  $region4: #{distilbert_forward.12} parent=0 // pred_region
    _
  $region5: #{distilbert_forward.12} parent=0 // pred_fallthru
    _
  // Predicated region
  $region6: #{distilbert_forward.12} parent=0 // pred_check
    _
  $region7: #{distilbert_forward.12} parent=0 // pred_check_branch
    %11 = sbr.rel (0) target = $region9
  $region8: #{distilbert_forward.12} parent=0 // pred_region
    _
  $region9: #{distilbert_forward.12} parent=0 // pred_fallthru
    _
  // Predicated region
  $region10: #{distilbert_forward.12} parent=0 // pred_check
    _
  $region11: #{distilbert_forward.12} parent=0 // pred_check_branch
    %13 = sbr.rel (0) target = $region13
  $region12: #{distilbert_forward.12} parent=0 // pred_region
    _
  $region13: #{distilbert_forward.12} parent=0 // pred_fallthru
    _
  %v14 = vld [vmem:[%s0] sm:$0xff]
  %v15 = vld [vmem:[%s0 + $0x8] sm:$0xff]
  %vm16 = vcmask 261120
  %v17 = vsel %vm16, %v14, 0.0
  %18 = vadd.xlane.f32.xlu0 %v17
  %v19 = vpop.xlane.xlu0 %18
  %v20 = vsel %vm16, %v15, 0.0
  %21 = vadd.xlane.f32.xlu0 %v20
  %v22 = vpop.xlane.xlu0 %21
  %v23 = vrcp.pop 32.0
  %v24 = vmul.f32 32.0, %v23
  %v25 = vsub.f32 1.0, %v24
  %v26 = vmul.f32 %v23, %v25
  %v27 = vadd.f32 %v23, %v26
  %vm28 = vweird.f32 %v23
  %v29 = vsel %vm28, %v23, %v27
  %v30 = vmul.f32 %v19, %v29
  %v31 = vmul.f32 %v22, %v29
  %v32 = vsub.f32 %v14, %v30
  %v33 = vsub.f32 %v15, %v31
  %v34 = vmul.f32 %v32, %v32
  %v35 = vmul.f32 %v33, %v33
  %v36 = vsel %vm16, %v34, 0.0
  %37 = vadd.xlane.f32.xlu0 %v36
  %v38 = vpop.xlane.xlu0 %37
  %v39 = vsel %vm16, %v35, 0.0
  %40 = vadd.xlane.f32.xlu0 %v39
  %v41 = vpop.xlane.xlu0 %40
  %v42 = vmul.f32 %v38, %v29
  %v43 = vmul.f32 %v41, %v29
  %v44 = vadd.f32 %v42, 1e-12
  %v45 = vadd.f32 %v43, 1e-12
  %v46 = vrsqrt.pop %v44
  %v47 = vmul.f32 %v46, %v44
  %v48 = vmul.f32 %v47, %v46
  %v49 = vmul.f32 0.5, %v48
  %v50 = vsub.f32 1.5, %v49
  %v51 = vmul.f32 %v46, %v50
  %vm52 = vweird.f32 %v44
  %vm53 = vweird.f32 %v46
  %vm54 = vmor %vm52, %vm53
  %v55 = vsel %vm54, %v46, %v51
  %v56 = vrsqrt.pop %v45
  %v57 = vmul.f32 %v56, %v45
  %v58 = vmul.f32 %v57, %v56
  %v59 = vmul.f32 0.5, %v58
  %v60 = vsub.f32 1.5, %v59
  %v61 = vmul.f32 %v56, %v60
  %vm62 = vweird.f32 %v45
  %vm63 = vweird.f32 %v56
  %vm64 = vmor %vm62, %vm63
  %v65 = vsel %vm64, %v56, %v61
  %v66 = vmul.f32 %v32, %v55
  %v67 = vmul.f32 %v33, %v65
  %v68 = vld [vmem:[%s1] sm:$0x1]
  %v70 = vperm.slane %v68, 0
  %v72 = vmul.f32 %v66, %v70
  %v73 = vmul.f32 %v67, %v70
  %v74 = vld [vmem:[%s2] sm:$0x1]
  %v76 = vperm.slane %v74, 0
  %v78 = vadd.f32 %v72, %v76
  %v79 = vadd.f32 %v73, %v76
  %80 = vst.msk [vmem:[%s3] sm:$0xff] %vm16, %v78
  %81 = vst.msk [vmem:[%s3 + $0x8] sm:$0xff] %vm16, %v79
  // Predicated region
  $region14: #{distilbert_forward.12} parent=0 // pred_check
    _
  $region15: #{distilbert_forward.12} parent=0 // pred_check_branch
    %83 = sbr.rel (0) target = $region17
  $region16: #{distilbert_forward.12} parent=0 // pred_region
    _
  $region17: #{distilbert_forward.12} parent=0 // pred_fallthru
    _
  // Predicated region
  $region18: #{distilbert_forward.12} parent=0 // pred_check
    _
  $region19: #{distilbert_forward.12} parent=0 // pred_check_branch
    %85 = sbr.rel (0) target = $region21
  $region20: #{distilbert_forward.12} parent=0 // pred_region
    _
  $region21: #{distilbert_forward.12} parent=0 // pred_fallthru
    _

// kernel: distilbert_forward.15
$region0: #{distilbert_forward.15}
  #allocation0 [shape = 'u32[]', space=smem, size = 0x4, offset = 0x4, fixed_abs, tag = 'smem constant byte address 0x4 - core index']
  #allocation1 [shape = 'u32[72,128]{1,0:T(1,128)}', space=vmem, size = 0x9000, scoped, tag = 'internal scratch']
  %s0 = inlined_call_operand.vmem [shape: f32[16,32], index: 0, kind: input, shape index: {}]
  %s1 = inlined_call_operand.vmem [shape: bf16[32,32], index: 1, kind: input, shape index: {}]
  %s2 = inlined_call_operand.vmem [shape: f32[1,32], index: 2, kind: input, shape index: {}]
  %s3 = inlined_call_operand.vmem [shape: f32[16,32], index: 3, kind: input, shape index: {}]
  %s4 = inlined_call_operand.vmem [shape: f32[1,32], index: 4, kind: input, shape index: {}]
  %s5 = inlined_call_operand.vmem [shape: f32[1,32], index: 5, kind: input, shape index: {}]
  %s6 = inlined_call_operand.vmem [shape: f32[16,32], index: 6, kind: output, shape index: {}]
  %s7 = sld [smem:[#allocation0]]
  $region34: #{distilbert_forward.15} parent=0
    _
  %s9 = ssub.s32 1, %s7
  %s10 = scalar_select 0, %s9, %s7
  // Predicated region
  $region2: #{distilbert_forward.15} parent=0 // pred_check
    _
  $region3: #{distilbert_forward.15} parent=0 // pred_check_branch
    %12 = sbr.rel (0) target = $region5
  $region4: #{distilbert_forward.15} parent=0 // pred_region
    _
  $region5: #{distilbert_forward.15} parent=0 // pred_fallthru
    _
  // Predicated region
  $region6: #{distilbert_forward.15} parent=0 // pred_check
    _
  $region7: #{distilbert_forward.15} parent=0 // pred_check_branch
    %14 = sbr.rel (0) target = $region9
  $region8: #{distilbert_forward.15} parent=0 // pred_region
    _
  $region9: #{distilbert_forward.15} parent=0 // pred_fallthru
    _
  // Predicated region
  $region10: #{distilbert_forward.15} parent=0 // pred_check
    _
  $region11: #{distilbert_forward.15} parent=0 // pred_check_branch
    %16 = sbr.rel (0) target = $region13
  $region12: #{distilbert_forward.15} parent=0 // pred_region
    _
  $region13: #{distilbert_forward.15} parent=0 // pred_fallthru
    _
  // Predicated region
  $region14: #{distilbert_forward.15} parent=0 // pred_check
    _
  $region15: #{distilbert_forward.15} parent=0 // pred_check_branch
    %18 = sbr.rel (0) target = $region17
  $region16: #{distilbert_forward.15} parent=0 // pred_region
    _
  $region17: #{distilbert_forward.15} parent=0 // pred_fallthru
    _
  // Predicated region
  $region18: #{distilbert_forward.15} parent=0 // pred_check
    _
  $region19: #{distilbert_forward.15} parent=0 // pred_check_branch
    %20 = sbr.rel (0) target = $region21
  $region20: #{distilbert_forward.15} parent=0 // pred_region
    _
  $region21: #{distilbert_forward.15} parent=0 // pred_fallthru
    _
  // Predicated region
  $region22: #{distilbert_forward.15} parent=0 // pred_check
    _
  $region23: #{distilbert_forward.15} parent=0 // pred_check_branch
    %22 = sbr.rel (0) target = $region25
  $region24: #{distilbert_forward.15} parent=0 // pred_region
    _
  $region25: #{distilbert_forward.15} parent=0 // pred_fallthru
    _
  %v24 = vld [vmem:[%s0] sm:$0xff]
  %v25 = vld [vmem:[%s0 + $0x8] sm:$0xff]
  %v26 = vpack.c.bf16 %v25, %v24
  %v27 = vld [vmem:[%s1] sm:$0xf]
  %v28 = vld [vmem:[%s1 + $0x4] sm:$0xf]
  %v29 = vld [vmem:[%s1 + $0x8] sm:$0xf]
  %v30 = vld [vmem:[%s1 + $0xc] sm:$0xf]
  %v31 = vld [vmem:[%s2] sm:$0x1]
  %v33 = vperm.slane %v31, 0
  %v39 = vunpack.c.l.b16 %v27
  %v40 = vunpack.c.l.b16 %v28
  %v41 = vunpack.c.l.b16 %v29
  %v42 = vunpack.c.l.b16 %v30
  %v43 = vpack.c.b16 %v40, %v39
  %v44 = vpack.c.b16 %v42, %v41
  %vm47 = vcmask 261120
  %v49 = vsel %vm47, %v26, 0
  %51 = vmatpush.bf16.msra.mxu0 0
  %52 = vmatpush.bf16.msra.mxu0 0
  %53 = vmatpush.bf16.msra.mxu0 0
  %54 = vmatpush.bf16.msra.mxu0 0
  %55 = vmatpush.bf16.msra.mxu0 0
  %56 = vmatpush.bf16.msra.mxu0 0
  %57 = vmatpush.bf16.msra.mxu0 %v44
  %58 = vmatpush.bf16.msra.mxu0 %v43
  %59 = vmatmul.bf16.gmra.mxu0 %v49
  %v60 = vpop.f32.mrf.mxu0
  %v61 = vadd.f32 %v33, %v60
  %v62 = vpop.f32.mrf.mxu0
  %v63 = vadd.f32 %v33, %v62
  %64 = vdwg.mxu0
  %v65 = vld [vmem:[%s3] sm:$0xff]
  %v66 = vld [vmem:[%s3 + $0x8] sm:$0xff]
  %v67 = vadd.f32 %v61, %v65
  %v68 = vadd.f32 %v63, %v66
  %v69 = vsel %vm47, %v67, 0.0
  %70 = vadd.xlane.f32.xlu0 %v69
  %v71 = vpop.xlane.xlu0 %70
  %v72 = vsel %vm47, %v68, 0.0
  %73 = vadd.xlane.f32.xlu0 %v72
  %v74 = vpop.xlane.xlu0 %73
  %v75 = vrcp.pop 32.0
  %v76 = vmul.f32 32.0, %v75
  %v77 = vsub.f32 1.0, %v76
  %v78 = vmul.f32 %v75, %v77
  %v79 = vadd.f32 %v75, %v78
  %vm80 = vweird.f32 %v75
  %v81 = vsel %vm80, %v75, %v79
  %v82 = vmul.f32 %v71, %v81
  %v83 = vmul.f32 %v74, %v81
  %v84 = vsub.f32 %v67, %v82
  %v85 = vsub.f32 %v68, %v83
  %v86 = vmul.f32 %v84, %v84
  %v87 = vmul.f32 %v85, %v85
  %v88 = vsel %vm47, %v86, 0.0
  %89 = vadd.xlane.f32.xlu0 %v88
  %v90 = vpop.xlane.xlu0 %89
  %v91 = vsel %vm47, %v87, 0.0
  %92 = vadd.xlane.f32.xlu0 %v91
  %v93 = vpop.xlane.xlu0 %92
  %v94 = vmul.f32 %v90, %v81
  %v95 = vmul.f32 %v93, %v81
  %v96 = vadd.f32 %v94, 1e-12
  %v97 = vadd.f32 %v95, 1e-12
  %v98 = vrsqrt.pop %v96
  %v99 = vmul.f32 %v98, %v96
  %v100 = vmul.f32 %v99, %v98
  %v101 = vmul.f32 0.5, %v100
  %v102 = vsub.f32 1.5, %v101
  %v103 = vmul.f32 %v98, %v102
  %vm104 = vweird.f32 %v96
  %vm105 = vweird.f32 %v98
  %vm106 = vmor %vm104, %vm105
  %v107 = vsel %vm106, %v98, %v103
  %v108 = vrsqrt.pop %v97
  %v109 = vmul.f32 %v108, %v97
  %v110 = vmul.f32 %v109, %v108
  %v111 = vmul.f32 0.5, %v110
  %v112 = vsub.f32 1.5, %v111
  %v113 = vmul.f32 %v108, %v112
  %vm114 = vweird.f32 %v97
  %vm115 = vweird.f32 %v108
  %vm116 = vmor %vm114, %vm115
  %v117 = vsel %vm116, %v108, %v113
  %v118 = vmul.f32 %v84, %v107
  %v119 = vmul.f32 %v85, %v117
  %v120 = vld [vmem:[%s4] sm:$0x1]
  %v122 = vperm.slane %v120, 0
  %v124 = vmul.f32 %v118, %v122
  %v125 = vmul.f32 %v119, %v122
  %v126 = vld [vmem:[%s5] sm:$0x1]
  %v128 = vperm.slane %v126, 0
  %v130 = vadd.f32 %v124, %v128
  %v131 = vadd.f32 %v125, %v128
  %132 = vst.msk [vmem:[%s6] sm:$0xff] %vm47, %v130
  %133 = vst.msk [vmem:[%s6 + $0x8] sm:$0xff] %vm47, %v131
  // Predicated region
  $region26: #{distilbert_forward.15} parent=0 // pred_check
    _
  $region27: #{distilbert_forward.15} parent=0 // pred_check_branch
    %135 = sbr.rel (0) target = $region29
  $region28: #{distilbert_forward.15} parent=0 // pred_region
    _
  $region29: #{distilbert_forward.15} parent=0 // pred_fallthru
    _
  // Predicated region
  $region30: #{distilbert_forward.15} parent=0 // pred_check
    _
  $region31: #{distilbert_forward.15} parent=0 // pred_check_branch
    %137 = sbr.rel (0) target = $region33
  $region32: #{distilbert_forward.15} parent=0 // pred_region
    _
  $region33: #{distilbert_forward.15} parent=0 // pred_fallthru
    _

// kernel: distilbert_forward.14
$region0: #{distilbert_forward.14}
  #allocation0 [shape = 'u32[]', space=smem, size = 0x4, offset = 0x4, fixed_abs, tag = 'smem constant byte address 0x4 - core index']
  #allocation1 [shape = 'u32[72,128]{1,0:T(1,128)}', space=vmem, size = 0x9000, scoped, tag = 'internal scratch']
  %s0 = inlined_call_operand.vmem [shape: f32[16,96], index: 0, kind: input, shape index: {}]
  %s1 = inlined_call_operand.vmem [shape: f32[2,1,8], index: 1, kind: input, shape index: {}]
  %s2 = inlined_call_operand.vmem [shape: f32[16,32], index: 2, kind: output, shape index: {}]
  %s3 = sld [smem:[#allocation0]]
  $region41: #{distilbert_forward.14} parent=0
    _
  %s5 = ssub.s32 1, %s3
  %s6 = scalar_select 0, %s5, %s3
  loop: start=0, step=1, limit=4
  $region2: #{distilbert_forward.14} parent=0 // loop_pre_header
    _
  $region3: #{distilbert_forward.14} parent=0 // loop_header
    %s8 = sphi 0, %s12
    %p9 = scmp.ge.s32.totalorder %s8, 4
    %s18 = sphi 0, %s20
    %s21 = sphi 0, %s18
    %s22 = sphi 0, %s21
    %s38 = sphi 0, %s22
    %s44 = sphi 0, %s46
    %s47 = sphi 0, %s44
    %s48 = sphi 0, %s47
    %s64 = sphi 0, %s48
    %s70 = sphi 0, %s72
    %s73 = sphi 0, %s70
    %s74 = sphi 0, %s73
    %s90 = sphi 0, %s74
  $region4: #{distilbert_forward.14} parent=0 // loop_header_branch
    %11 = sbr.rel (%p9) target = $region8
  $region5: #{distilbert_forward.14} parent=0 // loop_body
    %s13 = ssub.s32 %s8, 1
    %s14 = ssub.s32 %s8, 2
    %s15 = sadd.s32 %s8, 1
    %s16 = ssub.s32 %s8, %s15
    %p17 = scmp.eq.s32.totalorder %s16, 0
    %s19 = sadd.s32 %s18, 1
    %s20 = scalar_select %p17, %s18, %s19
    %p23 = pneg %p17
    %p24 = scmp.eq.s32.totalorder %s8, 1
    %p25 = por %p23, %p24
    %p26 = scmp.ne.s32.totalorder %s18, %s21
    %p27 = scmp.eq.s32.totalorder %s8, 0
    %p28 = por %p26, %p27
    %p29 = scmp.ne.s32.totalorder %s18, %s21
    %p30 = scmp.eq.s32.totalorder %s13, 1
    %p31 = por %p29, %p30
    %p32 = scmp.ne.s32.totalorder %s21, %s22
    %p33 = scmp.eq.s32.totalorder %s13, 0
    %p34 = por %p32, %p33
    %p35 = scmp.ne.s32.totalorder %s21, %s22
    %p36 = scmp.eq.s32.totalorder %s14, 1
    %p37 = por %p35, %p36
    %p39 = scmp.ne.s32.totalorder %s22, %s38
    %p40 = scmp.eq.s32.totalorder %s14, 0
    %p41 = por %p39, %p40
    %s42 = ssub.s32 %s8, %s15
    %p43 = scmp.eq.s32.totalorder %s42, 0
    %s45 = sadd.s32 %s44, 1
    %s46 = scalar_select %p43, %s44, %s45
    %p49 = pneg %p43
    %p50 = scmp.eq.s32.totalorder %s8, 1
    %p51 = por %p49, %p50
    %p52 = scmp.ne.s32.totalorder %s44, %s47
    %p53 = scmp.eq.s32.totalorder %s8, 0
    %p54 = por %p52, %p53
    %p55 = scmp.ne.s32.totalorder %s44, %s47
    %p56 = scmp.eq.s32.totalorder %s13, 1
    %p57 = por %p55, %p56
    %p58 = scmp.ne.s32.totalorder %s47, %s48
    %p59 = scmp.eq.s32.totalorder %s13, 0
    %p60 = por %p58, %p59
    %p61 = scmp.ne.s32.totalorder %s47, %s48
    %p62 = scmp.eq.s32.totalorder %s14, 1
    %p63 = por %p61, %p62
    %p65 = scmp.ne.s32.totalorder %s48, %s64
    %p66 = scmp.eq.s32.totalorder %s14, 0
    %p67 = por %p65, %p66
    %s68 = ssub.s32 %s8, %s15
    %p69 = scmp.eq.s32.totalorder %s68, 0
    %s71 = sadd.s32 %s70, 1
    %s72 = scalar_select %p69, %s70, %s71
    %p75 = pneg %p69
    %p76 = scmp.eq.s32.totalorder %s8, 1
    %p77 = por %p75, %p76
    %p78 = scmp.ne.s32.totalorder %s70, %s73
    %p79 = scmp.eq.s32.totalorder %s8, 0
    %p80 = por %p78, %p79
    %p81 = scmp.ne.s32.totalorder %s70, %s73
    %p82 = scmp.eq.s32.totalorder %s13, 1
    %p83 = por %p81, %p82
    %p84 = scmp.ne.s32.totalorder %s73, %s74
    %p85 = scmp.eq.s32.totalorder %s13, 0
    %p86 = por %p84, %p85
    %p87 = scmp.ne.s32.totalorder %s73, %s74
    %p88 = scmp.eq.s32.totalorder %s14, 1
    %p89 = por %p87, %p88
    %p91 = scmp.ne.s32.totalorder %s74, %s90
    %p92 = scmp.eq.s32.totalorder %s14, 0
    %p93 = por %p91, %p92
    %p94 = scmp.le.s32.totalorder 1, %s8
    %p95 = scmp.lt.s32.totalorder %s8, 3
    %p96 = pnand %p94, %p95
    %p97 = pneg %p96
    // Predicated region
    $region9: #{distilbert_forward.14} parent=5 // pred_check
      _
    $region10: #{distilbert_forward.14} parent=5 // pred_check_branch
      %99 = sbr.rel (%p96) target = $region12
    $region11: #{distilbert_forward.14} parent=5 // pred_region
      %s100 = ssub.s32 %s8, 1
    $region12: #{distilbert_forward.14} parent=5 // pred_fallthru
      _
    %p101 = scmp.lt.s32.totalorder %s8, 2
    // Predicated region
    $region13: #{distilbert_forward.14} parent=5 // pred_check
      %p102 = pneg %p101
    $region14: #{distilbert_forward.14} parent=5 // pred_check_branch
      %104 = sbr.rel (%p102) target = $region16
    $region15: #{distilbert_forward.14} parent=5 // pred_region
      // Predicated region
      $region17: #{distilbert_forward.14} parent=15 // pred_check
        %p105 = pneg %p28
      $region18: #{distilbert_forward.14} parent=15 // pred_check_branch
        %107 = sbr.rel (%p105) target = $region20
      $region19: #{distilbert_forward.14} parent=15 // pred_region
        %p108 = scmp.lt.s32.totalorder %s8, 1
        %s109 = scalar_select %p108, %s8, 1
        %s110 = smul.addr %s109, 8
        %s111 = scalar_lea.vmem %s0, %s110
      $region20: #{distilbert_forward.14} parent=15 // pred_fallthru
        _
      // Predicated region
      $region21: #{distilbert_forward.14} parent=15 // pred_check
        %p112 = pneg %p54
      $region22: #{distilbert_forward.14} parent=15 // pred_check_branch
        %114 = sbr.rel (%p112) target = $region24
      $region23: #{distilbert_forward.14} parent=15 // pred_region
        %p115 = scmp.lt.s32.totalorder %s8, 1
        %s116 = scalar_select %p115, %s8, 1
        %s117 = scalar_lea.vmem %s1, %s116
      $region24: #{distilbert_forward.14} parent=15 // pred_fallthru
        _
    $region16: #{distilbert_forward.14} parent=5 // pred_fallthru
      _
    %p118 = scmp.le.s32.totalorder 1, %s8
    %p119 = scmp.lt.s32.totalorder %s8, 3
    %p120 = pnand %p118, %p119
    %p121 = pneg %p120
    // Predicated region
    $region25: #{distilbert_forward.14} parent=5 // pred_check
      _
    $region26: #{distilbert_forward.14} parent=5 // pred_check_branch
      %123 = sbr.rel (%p120) target = $region28
    $region27: #{distilbert_forward.14} parent=5 // pred_region
      %s124 = ssub.s32 %s8, 1
      %p125 = scmp.lt.s32.totalorder %s13, 1
      %s126 = scalar_select %p125, %s13, 1
      %s127 = smul.addr %s126, 8
      %s128 = scalar_lea.vmem %s0, %s127
      %p129 = pneg %p34
      %p130 = pneg %p31
      %p131 = scmp.lt.s32.totalorder %s13, 1
      %s132 = scalar_select %p131, %s13, 1
      %s133 = scalar_lea.vmem %s1, %s132
      %p134 = pneg %p60
      %p135 = pneg %p57
      %p136 = pneg %p86
      %p137 = pneg %p83
      %p138 = scmp.lt.s32.totalorder %s13, 1
      %s139 = scalar_select %p138, %s13, 1
      %s140 = smul.addr %s139, 8
      %s141 = scalar_lea.vmem %s2, %s140
      %p142 = scmp.lt.s32.totalorder %s13, 1
      %s143 = scalar_select %p142, %s13, 1
      %s144 = smul.addr %s143, 8
      %s145 = scalar_lea.vmem %s0, %s144
      %p146 = scmp.lt.s32.totalorder %s13, 1
      %s147 = scalar_select %p146, %s13, 1
      %s148 = scalar_lea.vmem %s1, %s147
      %p149 = scmp.lt.s32.totalorder %s13, 1
      %s150 = scalar_select %p149, %s13, 1
      %s151 = smul.addr %s150, 8
      %s152 = scalar_lea.vmem %s2, %s151
      %v154 = vld [vmem:[%s145] sm:$0xff]
      %v155 = vld [vmem:[%s148] sm:$0x1]
      %v156 = vpack.c.bf16 %v154, %v154
      %158 = vrot.lane.b32.xlu0 %v156, 96
      %v159 = vpop.permute.xlu0 %158
      %vm160 = vcmask 64512
      %v162 = vsel %vm160, %v156, 0
      %v165 = vsel %vm160, %v159, 0
      %167 = vmatpush.bf16.xpose.msra.mxu0 0
      %168 = vmatpush.bf16.xpose.msra.mxu0 0
      %169 = vmatpush.bf16.xpose.msra.mxu0 0
      %170 = vmatpush.bf16.xpose.msra.mxu0 0
      %171 = vmatpush.bf16.xpose.msra.mxu0 0
      %172 = vmatpush.bf16.xpose.msra.mxu0 0
      %173 = vmatpush.bf16.xpose.msra.mxu0 0
      %174 = vmatpush.bf16.xpose.msra.mxu0 %v165
      %175 = vmatmul.bf16.gmra.mxu0 %v162
      %v176 = vpop.f32.mrf.mxu0
      %v177 = vadd.f32 0.0, %v176
      %v178 = vpop.f32.mrf.mxu0
      %179 = vdwg.mxu0
      %v180 = vmul.f32 %v177, 0.35355338
      %v182 = vperm.slane %v155, 0
      %v184 = vadd.f32 %v180, %v182
      %v185 = vsel %vm160, %v184, -inf
      %186 = vmax.xlane.f32.xlu0 %v185
      %v187 = vpop.xlane.xlu0 %186
      %v188 = vsub.f32 %v184, %v187
      %v189 = vmul.f32 %v188, 1.442695
      %v190 = vpow.pop %v189
      %v191 = vsel %vm160, %v190, 0.0
      %192 = vadd.xlane.f32.xlu0 %v191
      %v193 = vpop.xlane.xlu0 %192
      %v194 = vrcp.pop %v193
      %v195 = vmul.f32 %v190, %v194
      %v196 = vpack.c.bf16 %v195, %v195
      %197 = vrot.lane.b32.xlu0 %v156, 64
      %v198 = vpop.permute.xlu0 %197
      %v200 = vsel %vm160, %v196, 0
      %vm202 = vcmask 1043456
      %v204 = vsel %vm202, %v198, 0
      %206 = vmatpush.bf16.msra.mxu0 0
      %207 = vmatpush.bf16.msra.mxu0 0
      %208 = vmatpush.bf16.msra.mxu0 0
      %209 = vmatpush.bf16.msra.mxu0 0
      %210 = vmatpush.bf16.msra.mxu0 0
      %211 = vmatpush.bf16.msra.mxu0 0
      %212 = vmatpush.bf16.msra.mxu0 0
      %213 = vmatpush.bf16.msra.mxu0 %v204
      %214 = vmatmul.bf16.gmra.mxu0 %v200
      %v215 = vpop.f32.mrf.mxu0
      %v216 = vadd.f32 0.0, %v215
      %v217 = vpop.f32.mrf.mxu0
      %218 = vdwg.mxu0
      %219 = vrot.lane.b32.xlu0 %v156, 120
      %v220 = vpop.permute.xlu0 %219
      %221 = vrot.lane.b32.xlu0 %v156, 88
      %v222 = vpop.permute.xlu0 %221
      %v224 = vsel %vm160, %v220, 0
      %v227 = vsel %vm160, %v222, 0
      %229 = vmatpush.bf16.xpose.msra.mxu0 0
      %230 = vmatpush.bf16.xpose.msra.mxu0 0
      %231 = vmatpush.bf16.xpose.msra.mxu0 0
      %232 = vmatpush.bf16.xpose.msra.mxu0 0
      %233 = vmatpush.bf16.xpose.msra.mxu0 0
      %234 = vmatpush.bf16.xpose.msra.mxu0 0
      %235 = vmatpush.bf16.xpose.msra.mxu0 0
      %236 = vmatpush.bf16.xpose.msra.mxu0 %v227
      %237 = vmatmul.bf16.gmra.mxu0 %v224
      %v238 = vpop.f32.mrf.mxu0
      %v239 = vadd.f32 0.0, %v238
      %v240 = vpop.f32.mrf.mxu0
      %241 = vdwg.mxu0
      %v242 = vmul.f32 %v239, 0.35355338
      %v243 = vadd.f32 %v242, %v182
      %v244 = vsel %vm160, %v243, -inf
      %245 = vmax.xlane.f32.xlu0 %v244
      %v246 = vpop.xlane.xlu0 %245
      %v247 = vsub.f32 %v243, %v246
      %v248 = vmul.f32 %v247, 1.442695
      %v249 = vpow.pop %v248
      %v250 = vsel %vm160, %v249, 0.0
      %251 = vadd.xlane.f32.xlu0 %v250
      %v252 = vpop.xlane.xlu0 %251
      %v253 = vrcp.pop %v252
      %v254 = vmul.f32 %v249, %v253
      %v255 = vpack.c.bf16 %v254, %v254
      %256 = vrot.lane.b32.xlu0 %v156, 56
      %v257 = vpop.permute.xlu0 %256
      %v259 = vsel %vm160, %v255, 0
      %v262 = vsel %vm202, %v257, 0
      %264 = vmatpush.bf16.msra.mxu0 0
      %265 = vmatpush.bf16.msra.mxu0 0
      %266 = vmatpush.bf16.msra.mxu0 0
      %267 = vmatpush.bf16.msra.mxu0 0
      %268 = vmatpush.bf16.msra.mxu0 0
      %269 = vmatpush.bf16.msra.mxu0 0
      %270 = vmatpush.bf16.msra.mxu0 0
      %271 = vmatpush.bf16.msra.mxu0 %v262
      %272 = vmatmul.bf16.gmra.mxu0 %v259
      %v273 = vpop.f32.mrf.mxu0
      %v274 = vadd.f32 0.0, %v273
      %v275 = vpop.f32.mrf.mxu0
      %276 = vdwg.mxu0
      %277 = vrot.lane.b32.xlu0 %v156, 112
      %v278 = vpop.permute.xlu0 %277
      %279 = vrot.lane.b32.xlu0 %v156, 80
      %v280 = vpop.permute.xlu0 %279
      %v282 = vsel %vm160, %v278, 0
      %v285 = vsel %vm160, %v280, 0
      %287 = vmatpush.bf16.xpose.msra.mxu0 0
      %288 = vmatpush.bf16.xpose.msra.mxu0 0
      %289 = vmatpush.bf16.xpose.msra.mxu0 0
      %290 = vmatpush.bf16.xpose.msra.mxu0 0
      %291 = vmatpush.bf16.xpose.msra.mxu0 0
      %292 = vmatpush.bf16.xpose.msra.mxu0 0
      %293 = vmatpush.bf16.xpose.msra.mxu0 0
      %294 = vmatpush.bf16.xpose.msra.mxu0 %v285
      %295 = vmatmul.bf16.gmra.mxu0 %v282
      %v296 = vpop.f32.mrf.mxu0
      %v297 = vadd.f32 0.0, %v296
      %v298 = vpop.f32.mrf.mxu0
      %299 = vdwg.mxu0
      %v300 = vmul.f32 %v297, 0.35355338
      %v301 = vadd.f32 %v300, %v182
      %v302 = vsel %vm160, %v301, -inf
      %303 = vmax.xlane.f32.xlu0 %v302
      %v304 = vpop.xlane.xlu0 %303
      %v305 = vsub.f32 %v301, %v304
      %v306 = vmul.f32 %v305, 1.442695
      %v307 = vpow.pop %v306
      %v308 = vsel %vm160, %v307, 0.0
      %309 = vadd.xlane.f32.xlu0 %v308
      %v310 = vpop.xlane.xlu0 %309
      %v311 = vrcp.pop %v310
      %v312 = vmul.f32 %v307, %v311
      %v313 = vpack.c.bf16 %v312, %v312
      %314 = vrot.lane.b32.xlu0 %v156, 48
      %v315 = vpop.permute.xlu0 %314
      %v317 = vsel %vm160, %v313, 0
      %v320 = vsel %vm202, %v315, 0
      %322 = vmatpush.bf16.msra.mxu0 0
      %323 = vmatpush.bf16.msra.mxu0 0
      %324 = vmatpush.bf16.msra.mxu0 0
      %325 = vmatpush.bf16.msra.mxu0 0
      %326 = vmatpush.bf16.msra.mxu0 0
      %327 = vmatpush.bf16.msra.mxu0 0
      %328 = vmatpush.bf16.msra.mxu0 0
      %329 = vmatpush.bf16.msra.mxu0 %v320
      %330 = vmatmul.bf16.gmra.mxu0 %v317
      %v331 = vpop.f32.mrf.mxu0
      %v332 = vadd.f32 0.0, %v331
      %v333 = vpop.f32.mrf.mxu0
      %334 = vdwg.mxu0
      %335 = vrot.lane.b32.xlu0 %v156, 104
      %v336 = vpop.permute.xlu0 %335
      %337 = vrot.lane.b32.xlu0 %v156, 72
      %v338 = vpop.permute.xlu0 %337
      %v340 = vsel %vm160, %v336, 0
      %v343 = vsel %vm160, %v338, 0
      %345 = vmatpush.bf16.xpose.msra.mxu0 0
      %346 = vmatpush.bf16.xpose.msra.mxu0 0
      %347 = vmatpush.bf16.xpose.msra.mxu0 0
      %348 = vmatpush.bf16.xpose.msra.mxu0 0
      %349 = vmatpush.bf16.xpose.msra.mxu0 0
      %350 = vmatpush.bf16.xpose.msra.mxu0 0
      %351 = vmatpush.bf16.xpose.msra.mxu0 0
      %352 = vmatpush.bf16.xpose.msra.mxu0 %v343
      %353 = vmatmul.bf16.gmra.mxu0 %v340
      %v354 = vpop.f32.mrf.mxu0
      %v355 = vadd.f32 0.0, %v354
      %v356 = vpop.f32.mrf.mxu0
      %357 = vdwg.mxu0
      %v358 = vmul.f32 %v355, 0.35355338
      %v359 = vadd.f32 %v358, %v182
      %v360 = vsel %vm160, %v359, -inf
      %361 = vmax.xlane.f32.xlu0 %v360
      %v362 = vpop.xlane.xlu0 %361
      %v363 = vsub.f32 %v359, %v362
      %v364 = vmul.f32 %v363, 1.442695
      %v365 = vpow.pop %v364
      %v366 = vsel %vm160, %v365, 0.0
      %367 = vadd.xlane.f32.xlu0 %v366
      %v368 = vpop.xlane.xlu0 %367
      %v369 = vrcp.pop %v368
      %v370 = vmul.f32 %v365, %v369
      %v371 = vpack.c.bf16 %v370, %v370
      %372 = vrot.lane.b32.xlu0 %v156, 40
      %v373 = vpop.permute.xlu0 %372
      %v375 = vsel %vm160, %v371, 0
      %v378 = vsel %vm202, %v373, 0
      %380 = vmatpush.bf16.msra.mxu0 0
      %381 = vmatpush.bf16.msra.mxu0 0
      %382 = vmatpush.bf16.msra.mxu0 0
      %383 = vmatpush.bf16.msra.mxu0 0
      %384 = vmatpush.bf16.msra.mxu0 0
      %385 = vmatpush.bf16.msra.mxu0 0
      %386 = vmatpush.bf16.msra.mxu0 0
      %387 = vmatpush.bf16.msra.mxu0 %v378
      %388 = vmatmul.bf16.gmra.mxu0 %v375
      %v389 = vpop.f32.mrf.mxu0
      %v390 = vadd.f32 0.0, %v389
      %v391 = vpop.f32.mrf.mxu0
      %392 = vdwg.mxu0
      %394 = vrot.lane.b32.xlu0 %v274, 8
      %v395 = vpop.permute.xlu0 %394
      %398 = vrot.lane.b32.xlu0 %v332, 16
      %v399 = vpop.permute.xlu0 %398
      %402 = vrot.lane.b32.xlu0 %v390, 24
      %v403 = vpop.permute.xlu0 %402
      %v405 = vsel %vm160, %v216, %v395
      %vm406 = vcmask 130048
      %v407 = vsel %vm406, %v405, %v399
      %vm408 = vcmask 195584
      %v409 = vsel %vm408, %v407, %v403
      %vm410 = vcmask 261120
      %411 = vst.msk [vmem:[%s152] sm:$0xff] %vm410, %v409
      %p412 = scmp.lt.s32.totalorder %s13, 1
      %s413 = scalar_select %p412, %s13, 1
      %s414 = smul.addr %s413, 8
      %s415 = scalar_lea.vmem %s2, %s414
      // Predicated region
      $region29: #{distilbert_forward.14} parent=27 // pred_check
        %p416 = pneg %p83
      $region30: #{distilbert_forward.14} parent=27 // pred_check_branch
        %418 = sbr.rel (%p416) target = $region32
      $region31: #{distilbert_forward.14} parent=27 // pred_region
        _
      $region32: #{distilbert_forward.14} parent=27 // pred_fallthru
        _
    $region28: #{distilbert_forward.14} parent=5 // pred_fallthru
      _
    %p419 = scmp.le.s32.totalorder 2, %s8
    // Predicated region
    $region33: #{distilbert_forward.14} parent=5 // pred_check
      %p420 = pneg %p419
    $region34: #{distilbert_forward.14} parent=5 // pred_check_branch
      %422 = sbr.rel (%p420) target = $region36
    $region35: #{distilbert_forward.14} parent=5 // pred_region
      %s423 = ssub.s32 %s8, 2
      // Predicated region
      $region37: #{distilbert_forward.14} parent=35 // pred_check
        %p424 = pneg %p89
      $region38: #{distilbert_forward.14} parent=35 // pred_check_branch
        %426 = sbr.rel (%p424) target = $region40
      $region39: #{distilbert_forward.14} parent=35 // pred_region
        %p427 = scmp.lt.s32.totalorder %s14, 1
        %s428 = scalar_select %p427, %s14, 1
        %s429 = smul.addr %s428, 8
        %s430 = scalar_lea.vmem %s2, %s429
      $region40: #{distilbert_forward.14} parent=35 // pred_fallthru
        _
    $region36: #{distilbert_forward.14} parent=5 // pred_fallthru
      _
  $region6: #{distilbert_forward.14} parent=0 // loop_footer
    %s12 = sadd.s32 1, %s8
  $region7: #{distilbert_forward.14} parent=0 // loop_footer_branch
    %7 = sbr.rel target = $region3
  $region8: #{distilbert_forward.14} parent=0 // loop_exit
    _

// kernel: distilbert_forward.17
$region0: #{distilbert_forward.17}
  #allocation0 [shape = 'u32[]', space=smem, size = 0x4, offset = 0x4, fixed_abs, tag = 'smem constant byte address 0x4 - core index']
  #allocation1 [shape = 'u32[72,128]{1,0:T(1,128)}', space=vmem, size = 0x9000, scoped, tag = 'internal scratch']
  %s0 = inlined_call_operand.vmem [shape: f32[16,64], index: 0, kind: input, shape index: {}]
  %s1 = inlined_call_operand.vmem [shape: bf16[64,32], index: 1, kind: input, shape index: {}]
  %s2 = inlined_call_operand.vmem [shape: f32[1,32], index: 2, kind: input, shape index: {}]
  %s3 = inlined_call_operand.vmem [shape: f32[16,32], index: 3, kind: input, shape index: {}]
  %s4 = inlined_call_operand.vmem [shape: f32[1,32], index: 4, kind: input, shape index: {}]
  %s5 = inlined_call_operand.vmem [shape: f32[1,32], index: 5, kind: input, shape index: {}]
  %s6 = inlined_call_operand.vmem [shape: f32[16,32], index: 6, kind: output, shape index: {}]
  %s7 = sld [smem:[#allocation0]]
  $region34: #{distilbert_forward.17} parent=0
    _
  %s9 = ssub.s32 1, %s7
  %s10 = scalar_select 0, %s9, %s7
  // Predicated region
  $region2: #{distilbert_forward.17} parent=0 // pred_check
    _
  $region3: #{distilbert_forward.17} parent=0 // pred_check_branch
    %12 = sbr.rel (0) target = $region5
  $region4: #{distilbert_forward.17} parent=0 // pred_region
    _
  $region5: #{distilbert_forward.17} parent=0 // pred_fallthru
    _
  // Predicated region
  $region6: #{distilbert_forward.17} parent=0 // pred_check
    _
  $region7: #{distilbert_forward.17} parent=0 // pred_check_branch
    %14 = sbr.rel (0) target = $region9
  $region8: #{distilbert_forward.17} parent=0 // pred_region
    _
  $region9: #{distilbert_forward.17} parent=0 // pred_fallthru
    _
  // Predicated region
  $region10: #{distilbert_forward.17} parent=0 // pred_check
    _
  $region11: #{distilbert_forward.17} parent=0 // pred_check_branch
    %16 = sbr.rel (0) target = $region13
  $region12: #{distilbert_forward.17} parent=0 // pred_region
    _
  $region13: #{distilbert_forward.17} parent=0 // pred_fallthru
    _
  // Predicated region
  $region14: #{distilbert_forward.17} parent=0 // pred_check
    _
  $region15: #{distilbert_forward.17} parent=0 // pred_check_branch
    %18 = sbr.rel (0) target = $region17
  $region16: #{distilbert_forward.17} parent=0 // pred_region
    _
  $region17: #{distilbert_forward.17} parent=0 // pred_fallthru
    _
  // Predicated region
  $region18: #{distilbert_forward.17} parent=0 // pred_check
    _
  $region19: #{distilbert_forward.17} parent=0 // pred_check_branch
    %20 = sbr.rel (0) target = $region21
  $region20: #{distilbert_forward.17} parent=0 // pred_region
    _
  $region21: #{distilbert_forward.17} parent=0 // pred_fallthru
    _
  // Predicated region
  $region22: #{distilbert_forward.17} parent=0 // pred_check
    _
  $region23: #{distilbert_forward.17} parent=0 // pred_check_branch
    %22 = sbr.rel (0) target = $region25
  $region24: #{distilbert_forward.17} parent=0 // pred_region
    _
  $region25: #{distilbert_forward.17} parent=0 // pred_fallthru
    _
  %v24 = vld [vmem:[%s0] sm:$0xff]
  %v25 = vld [vmem:[%s0 + $0x8] sm:$0xff]
  %v26 = vpack.c.bf16 %v25, %v24
  %v27 = vld [vmem:[%s1] sm:$0xf]
  %v28 = vld [vmem:[%s1 + $0x4] sm:$0xf]
  %v29 = vld [vmem:[%s1 + $0x8] sm:$0xf]
  %v30 = vld [vmem:[%s1 + $0xc] sm:$0xf]
  %v31 = vld [vmem:[%s1 + $0x10] sm:$0xf]
  %v32 = vld [vmem:[%s1 + $0x14] sm:$0xf]
  %v33 = vld [vmem:[%s1 + $0x18] sm:$0xf]
  %v34 = vld [vmem:[%s1 + $0x1c] sm:$0xf]
  %v35 = vld [vmem:[%s2] sm:$0x1]
  %v37 = vperm.slane %v35, 0
  %v47 = vunpack.c.l.b16 %v27
  %v48 = vunpack.c.l.b16 %v28
  %v49 = vunpack.c.l.b16 %v29
  %v50 = vunpack.c.l.b16 %v30
  %v51 = vunpack.c.l.b16 %v31
  %v52 = vunpack.c.l.b16 %v32
  %v53 = vunpack.c.l.b16 %v33
  %v54 = vunpack.c.l.b16 %v34
  %v55 = vpack.c.b16 %v48, %v47
  %v56 = vpack.c.b16 %v50, %v49
  %v57 = vpack.c.b16 %v52, %v51
  %v58 = vpack.c.b16 %v54, %v53
  %vm63 = vcmask 523264
  %v65 = vsel %vm63, %v26, 0
  %67 = vmatpush.bf16.msra.mxu0 0
  %68 = vmatpush.bf16.msra.mxu0 0
  %69 = vmatpush.bf16.msra.mxu0 0
  %70 = vmatpush.bf16.msra.mxu0 0
  %71 = vmatpush.bf16.msra.mxu0 %v58
  %72 = vmatpush.bf16.msra.mxu0 %v57
  %73 = vmatpush.bf16.msra.mxu0 %v56
  %74 = vmatpush.bf16.msra.mxu0 %v55
  %75 = vmatmul.bf16.gmra.mxu0 %v65
  %v76 = vpop.f32.mrf.mxu0
  %v77 = vadd.f32 %v37, %v76
  %v78 = vpop.f32.mrf.mxu0
  %v79 = vadd.f32 %v37, %v78
  %80 = vdwg.mxu0
  %v81 = vld [vmem:[%s3] sm:$0xff]
  %v82 = vld [vmem:[%s3 + $0x8] sm:$0xff]
  %v83 = vadd.f32 %v77, %v81
  %v84 = vadd.f32 %v79, %v82
  %vm85 = vcmask 261120
  %v86 = vsel %vm85, %v83, 0.0
  %87 = vadd.xlane.f32.xlu0 %v86
  %v88 = vpop.xlane.xlu0 %87
  %v89 = vsel %vm85, %v84, 0.0
  %90 = vadd.xlane.f32.xlu0 %v89
  %v91 = vpop.xlane.xlu0 %90
  %v92 = vrcp.pop 32.0
  %v93 = vmul.f32 32.0, %v92
  %v94 = vsub.f32 1.0, %v93
  %v95 = vmul.f32 %v92, %v94
  %v96 = vadd.f32 %v92, %v95
  %vm97 = vweird.f32 %v92
  %v98 = vsel %vm97, %v92, %v96
  %v99 = vmul.f32 %v88, %v98
  %v100 = vmul.f32 %v91, %v98
  %v101 = vsub.f32 %v83, %v99
  %v102 = vsub.f32 %v84, %v100
  %v103 = vmul.f32 %v101, %v101
  %v104 = vmul.f32 %v102, %v102
  %v105 = vsel %vm85, %v103, 0.0
  %106 = vadd.xlane.f32.xlu0 %v105
  %v107 = vpop.xlane.xlu0 %106
  %v108 = vsel %vm85, %v104, 0.0
  %109 = vadd.xlane.f32.xlu0 %v108
  %v110 = vpop.xlane.xlu0 %109
  %v111 = vmul.f32 %v107, %v98
  %v112 = vmul.f32 %v110, %v98
  %v113 = vadd.f32 %v111, 1e-12
  %v114 = vadd.f32 %v112, 1e-12
  %v115 = vrsqrt.pop %v113
  %v116 = vmul.f32 %v115, %v113
  %v117 = vmul.f32 %v116, %v115
  %v118 = vmul.f32 0.5, %v117
  %v119 = vsub.f32 1.5, %v118
  %v120 = vmul.f32 %v115, %v119
  %vm121 = vweird.f32 %v113
  %vm122 = vweird.f32 %v115
  %vm123 = vmor %vm121, %vm122
  %v124 = vsel %vm123, %v115, %v120
  %v125 = vrsqrt.pop %v114
  %v126 = vmul.f32 %v125, %v114
  %v127 = vmul.f32 %v126, %v125
  %v128 = vmul.f32 0.5, %v127
  %v129 = vsub.f32 1.5, %v128
  %v130 = vmul.f32 %v125, %v129
  %vm131 = vweird.f32 %v114
  %vm132 = vweird.f32 %v125
  %vm133 = vmor %vm131, %vm132
  %v134 = vsel %vm133, %v125, %v130
  %v135 = vmul.f32 %v101, %v124
  %v136 = vmul.f32 %v102, %v134
  %v137 = vld [vmem:[%s4] sm:$0x1]
  %v139 = vperm.slane %v137, 0
  %v141 = vmul.f32 %v135, %v139
  %v142 = vmul.f32 %v136, %v139
  %v143 = vld [vmem:[%s5] sm:$0x1]
  %v145 = vperm.slane %v143, 0
  %v147 = vadd.f32 %v141, %v145
  %v148 = vadd.f32 %v142, %v145
  %149 = vst.msk [vmem:[%s6] sm:$0xff] %vm85, %v147
  %150 = vst.msk [vmem:[%s6 + $0x8] sm:$0xff] %vm85, %v148
  // Predicated region
  $region26: #{distilbert_forward.17} parent=0 // pred_check
    _
  $region27: #{distilbert_forward.17} parent=0 // pred_check_branch
    %152 = sbr.rel (0) target = $region29
  $region28: #{distilbert_forward.17} parent=0 // pred_region
    _
  $region29: #{distilbert_forward.17} parent=0 // pred_fallthru
    _
  // Predicated region
  $region30: #{distilbert_forward.17} parent=0 // pred_check
    _
  $region31: #{distilbert_forward.17} parent=0 // pred_check_branch
    %154 = sbr.rel (0) target = $region33
  $region32: #{distilbert_forward.17} parent=0 // pred_region
    _
  $region33: #{distilbert_forward.17} parent=0 // pred_fallthru
    _

// kernel: distilbert_forward.23
$region0: #{distilbert_forward.23}
  #allocation0 [shape = 'u32[]', space=smem, size = 0x4, offset = 0x4, fixed_abs, tag = 'smem constant byte address 0x4 - core index']
  #allocation1 [shape = 'u32[72,128]{1,0:T(1,128)}', space=vmem, size = 0x9000, scoped, tag = 'internal scratch']
  %s0 = inlined_call_operand.vmem [shape: f32[2,32], index: 0, kind: input, shape index: {}]
  %s1 = inlined_call_operand.vmem [shape: bf16[32,4], index: 1, kind: input, shape index: {}]
  %s2 = inlined_call_operand.vmem [shape: f32[1,4], index: 2, kind: input, shape index: {}]
  %s3 = inlined_call_operand.hbm [shape: f32[2,4], index: 3, kind: output, shape index: {}]
  %s4 = sld [smem:[#allocation0]]
  $region22: #{distilbert_forward.23} parent=0
    _
  %s6 = ssub.s32 1, %s4
  %s7 = scalar_select 0, %s6, %s4
  $region1: #{distilbert_forward.23} parent=0
    #allocation2 [shape = 'u8[1024]{0}', space=vmem, size = 0x400, scoped, tag = 'output window, operand 0, single buffered']
    #allocation3 [shape = 's32[1]{0}', space=sflag, size = 0x4, scoped, tag = 'scoped memory for distilbert_forward.23']
    %8 = vsyncpa [#allocation3], 0
    // Predicated region
    $region2: #{distilbert_forward.23} parent=1 // pred_check
      _
    $region3: #{distilbert_forward.23} parent=1 // pred_check_branch
      %10 = sbr.rel (0) target = $region5
    $region4: #{distilbert_forward.23} parent=1 // pred_region
      _
    $region5: #{distilbert_forward.23} parent=1 // pred_fallthru
      _
    // Predicated region
    $region6: #{distilbert_forward.23} parent=1 // pred_check
      _
    $region7: #{distilbert_forward.23} parent=1 // pred_check_branch
      %12 = sbr.rel (0) target = $region9
    $region8: #{distilbert_forward.23} parent=1 // pred_region
      _
    $region9: #{distilbert_forward.23} parent=1 // pred_fallthru
      _
    // Predicated region
    $region10: #{distilbert_forward.23} parent=1 // pred_check
      _
    $region11: #{distilbert_forward.23} parent=1 // pred_check_branch
      %14 = sbr.rel (0) target = $region13
    $region12: #{distilbert_forward.23} parent=1 // pred_region
      _
    $region13: #{distilbert_forward.23} parent=1 // pred_fallthru
      _
    %v16 = vld [vmem:[%s0] sm:$0x3]
    %v17 = vpack.c.bf16 %v16, %v16
    %v18 = vld [vmem:[%s1] sm:$0xf]
    %v19 = vld [vmem:[%s1 + $0x4] sm:$0xf]
    %v20 = vld [vmem:[%s1 + $0x8] sm:$0xf]
    %v21 = vld [vmem:[%s1 + $0xc] sm:$0xf]
    %v22 = vld [vmem:[%s2] sm:$0x1]
    %v24 = vperm.slane %v22, 0
    %v30 = vunpack.c.l.b16 %v18
    %v31 = vunpack.c.l.b16 %v19
    %v32 = vunpack.c.l.b16 %v20
    %v33 = vunpack.c.l.b16 %v21
    %v34 = vpack.c.b16 %v31, %v30
    %v35 = vpack.c.b16 %v33, %v32
    %vm38 = vcmask 261120
    %v40 = vsel %vm38, %v17, 0
    %42 = vmatpush.bf16.msra.mxu0 0
    %43 = vmatpush.bf16.msra.mxu0 0
    %44 = vmatpush.bf16.msra.mxu0 0
    %45 = vmatpush.bf16.msra.mxu0 0
    %46 = vmatpush.bf16.msra.mxu0 0
    %47 = vmatpush.bf16.msra.mxu0 0
    %48 = vmatpush.bf16.msra.mxu0 %v35
    %49 = vmatpush.bf16.msra.mxu0 %v34
    %50 = vmatmul.bf16.gmra.mxu0 %v40
    %v51 = vpop.f32.mrf.mxu0
    %v52 = vadd.f32 %v24, %v51
    %v53 = vpop.f32.mrf.mxu0
    %54 = vdwg.mxu0
    %vm55 = vcmask 25600
    %56 = vst.msk [vmem:[#allocation2] sm:$0x3] %vm55, %v52
    // Predicated region
    $region14: #{distilbert_forward.23} parent=1 // pred_check
      _
    $region15: #{distilbert_forward.23} parent=1 // pred_check_branch
      %58 = sbr.rel (0) target = $region17
    $region16: #{distilbert_forward.23} parent=1 // pred_region
      %60 = vsyncadd [#allocation3], 0
      %s62 = sshll.u32 [#allocation2], 4
      %s63 = int_to_ptr.vmem [resolvable:$true] %s62
      %s64 = sshll.u32 %s3, 4
      %s65 = int_to_ptr.hbm [resolvable:$true] %s64
      %67 = dma.vmem_to_hbm [thread:$0]  %s63, 32, %s65, [#allocation3]
    $region17: #{distilbert_forward.23} parent=1 // pred_fallthru
      _
    // Predicated region
    $region18: #{distilbert_forward.23} parent=1 // pred_check
      _
    $region19: #{distilbert_forward.23} parent=1 // pred_check_branch
      %69 = sbr.rel (0) target = $region21
    $region20: #{distilbert_forward.23} parent=1 // pred_region
      %71 = dma.done [#allocation3], 32
    $region21: #{distilbert_forward.23} parent=1 // pred_fallthru
      _
    %72 = vsyncpa [#allocation3], 1

// kernel: distilbert_forward.16
$region0: #{distilbert_forward.16}
  #allocation0 [shape = 'u32[]', space=smem, size = 0x4, offset = 0x4, fixed_abs, tag = 'smem constant byte address 0x4 - core index']
  #allocation1 [shape = 'u32[72,128]{1,0:T(1,128)}', space=vmem, size = 0x9000, scoped, tag = 'internal scratch']
  %s0 = inlined_call_operand.vmem [shape: f32[16,32], index: 0, kind: input, shape index: {}]
  %s1 = inlined_call_operand.vmem [shape: bf16[32,64], index: 1, kind: input, shape index: {}]
  %s2 = inlined_call_operand.vmem [shape: f32[1,64], index: 2, kind: input, shape index: {}]
  %s3 = inlined_call_operand.vmem [shape: f32[16,64], index: 3, kind: output, shape index: {}]
  %s4 = sld [smem:[#allocation0]]
  $region22: #{distilbert_forward.16} parent=0
    _
  %s6 = ssub.s32 1, %s4
  %s7 = scalar_select 0, %s6, %s4
  // Predicated region
  $region2: #{distilbert_forward.16} parent=0 // pred_check
    _
  $region3: #{distilbert_forward.16} parent=0 // pred_check_branch
    %9 = sbr.rel (0) target = $region5
  $region4: #{distilbert_forward.16} parent=0 // pred_region
    _
  $region5: #{distilbert_forward.16} parent=0 // pred_fallthru
    _
  // Predicated region
  $region6: #{distilbert_forward.16} parent=0 // pred_check
    _
  $region7: #{distilbert_forward.16} parent=0 // pred_check_branch
    %11 = sbr.rel (0) target = $region9
  $region8: #{distilbert_forward.16} parent=0 // pred_region
    _
  $region9: #{distilbert_forward.16} parent=0 // pred_fallthru
    _
  // Predicated region
  $region10: #{distilbert_forward.16} parent=0 // pred_check
    _
  $region11: #{distilbert_forward.16} parent=0 // pred_check_branch
    %13 = sbr.rel (0) target = $region13
  $region12: #{distilbert_forward.16} parent=0 // pred_region
    _
  $region13: #{distilbert_forward.16} parent=0 // pred_fallthru
    _
  %v15 = vld [vmem:[%s0] sm:$0xff]
  %v16 = vld [vmem:[%s0 + $0x8] sm:$0xff]
  %v17 = vpack.c.bf16 %v16, %v15
  %v18 = vld [vmem:[%s1] sm:$0xf]
  %v19 = vld [vmem:[%s1 + $0x4] sm:$0xf]
  %v20 = vld [vmem:[%s1 + $0x8] sm:$0xf]
  %v21 = vld [vmem:[%s1 + $0xc] sm:$0xf]
  %v22 = vld [vmem:[%s2] sm:$0x1]
  %v24 = vperm.slane %v22, 0
  %v30 = vunpack.c.l.b16 %v18
  %v31 = vunpack.c.l.b16 %v19
  %v32 = vunpack.c.l.b16 %v20
  %v33 = vunpack.c.l.b16 %v21
  %v34 = vpack.c.b16 %v31, %v30
  %v35 = vpack.c.b16 %v33, %v32
  %vm38 = vcmask 261120
  %v40 = vsel %vm38, %v17, 0
  %42 = vmatpush.bf16.msra.mxu0 0
  %43 = vmatpush.bf16.msra.mxu0 0
  %44 = vmatpush.bf16.msra.mxu0 0
  %45 = vmatpush.bf16.msra.mxu0 0
  %46 = vmatpush.bf16.msra.mxu0 0
  %47 = vmatpush.bf16.msra.mxu0 0
  %48 = vmatpush.bf16.msra.mxu0 %v35
  %49 = vmatpush.bf16.msra.mxu0 %v34
  %50 = vmatmul.bf16.gmra.mxu0 %v40
  %v51 = vpop.f32.mrf.mxu0
  %v52 = vadd.f32 %v24, %v51
  %v53 = vpop.f32.mrf.mxu0
  %v54 = vadd.f32 %v24, %v53
  %55 = vdwg.mxu0
  %v56 = vmul.f32 %v52, 0.5
  %v57 = vmul.f32 %v54, 0.5
  %v58 = vmul.f32 %v52, 0.044715
  %v59 = vmul.f32 %v54, 0.044715
  %v60 = vmul.f32 %v58, %v52
  %v61 = vmul.f32 %v59, %v54
  %v62 = vmul.f32 %v60, %v52
  %v63 = vmul.f32 %v61, %v54
  %v64 = vadd.f32 %v52, %v62
  %v65 = vadd.f32 %v54, %v63
  %v66 = vmul.f32 %v64, 0.7978846
  %v67 = vmul.f32 %v65, 0.7978846
  %v68 = vtanh.pop %v66
  %v69 = vtanh.pop %v67
  %v70 = vadd.f32 %v68, 1.0
  %v71 = vadd.f32 %v69, 1.0
  %v72 = vmul.f32 %v56, %v70
  %v73 = vmul.f32 %v57, %v71
  %vm74 = vcmask 523264
  %75 = vst.msk [vmem:[%s3] sm:$0xff] %vm74, %v72
  %76 = vst.msk [vmem:[%s3 + $0x8] sm:$0xff] %vm74, %v73
  // Predicated region
  $region14: #{distilbert_forward.16} parent=0 // pred_check
    _
  $region15: #{distilbert_forward.16} parent=0 // pred_check_branch
    %78 = sbr.rel (0) target = $region17
  $region16: #{distilbert_forward.16} parent=0 // pred_region
    _
  $region17: #{distilbert_forward.16} parent=0 // pred_fallthru
    _
  // Predicated region
  $region18: #{distilbert_forward.16} parent=0 // pred_check
    _
  $region19: #{distilbert_forward.16} parent=0 // pred_check_branch
    %80 = sbr.rel (0) target = $region21
  $region20: #{distilbert_forward.16} parent=0 // pred_region
    _
  $region21: #{distilbert_forward.16} parent=0 // pred_fallthru
    _

</llo_original>
